<compile_context>
chip_gen: v5e
topology: v5e:2x2
jax: 0.10.0
libtpu: 0.0.40
codegen_flags: <defaults>
</compile_context>

<pallas_src>
import functools
import math
from typing import NamedTuple

import jax
import jax.numpy as jnp
from jax.experimental import pallas as pl
from jax.experimental.pallas import tpu as pltpu

_LANE = 128
_SUBLANE = 8
_MIB = 1024 * 1024


def _round_up(a: int, b: int) -> int:
    return (a + b - 1) // b * b


# --------------------------------------------------------------------------
# Hardware-aware budgets
# --------------------------------------------------------------------------
@functools.lru_cache(maxsize=None)
def _hw_budgets():
    """(vmem_limit_bytes, w_tile_budget, x_tile_budget) — generation aware."""
    vmem_cap = 64 * _MIB            # conservative default (v7x per-TensorCore VMEM)
    try:
        cap = getattr(pltpu.get_tpu_info(), "vmem_capacity_bytes", None)
        if cap:
            vmem_cap = int(cap)
    except Exception:
        pass
    # Leave headroom for Mosaic internal scratch; never exceed ~80% of physical.
    vmem_limit = max(32 * _MIB, min(vmem_cap - 12 * _MIB, int(vmem_cap * 0.8)))
    x_budget = 4 * _MIB                                       # per x buffer (x2 pipelined)
    w_budget = (vmem_limit - 2 * x_budget - 2 * _MIB) // 2    # per W buffer (x2 pipelined)
    w_budget = max(8 * _MIB, min(32 * _MIB, w_budget))
    return int(vmem_limit), int(w_budget), int(x_budget)


@functools.lru_cache(maxsize=None)
def _num_tensorcores():
    """Number of TensorCores that a 'parallel' grid axis is sharded across."""
    try:
        info = pltpu.get_tpu_info()
        for name in ("tensorcores_per_chip", "num_tensorcores",
                     "cores_per_chip", "num_cores"):
            v = getattr(info, name, None)
            if v:
                return max(1, min(4, int(v)))
    except Exception:
        pass
    try:
        kind = jax.devices()[0].device_kind.lower()
        # v4 / v5p (megacore) and v7x (dual TC) shard "parallel" axes across 2
        # TensorCores; the lite chips (v5e / v6e) have a single core.
        if ("v7" in kind) or ("v5p" in kind) or ("v4" in kind):
            return 2
    except Exception:
        pass
    return 1


# --------------------------------------------------------------------------
# Tile planning
# --------------------------------------------------------------------------
def _choose_tile(dim128: int, max_t: int, prefer_count_multiple: int = 1) -> int:
    """Pick a lane-multiple tile size <= max_t for a dim already rounded to 128.

    Prefers the largest tile whose zero-padding waste is <= ~3% (padding = extra
    streamed W bytes), and, for multi-TensorCore chips, a tile count that splits
    evenly across cores.
    """
    max_t = max(_LANE, min(max_t, dim128))
    max_t = (max_t // _LANE) * _LANE
    cands = list(range(max_t, _LANE - 1, -_LANE))

    def waste(t):
        return _round_up(dim128, t) - dim128

    ok = [t for t in cands if waste(t) * 32 <= dim128]
    if not ok:
        mw = min(waste(t) for t in cands)
        ok = [t for t in cands if waste(t) == mw]
    if prefer_count_multiple > 1:
        even = [t for t in ok
                if (_round_up(dim128, t) // t) % prefer_count_multiple == 0]
        if even:
            return even[0]
    return ok[0]


def _largest_lane_divisor(n: int, cap: int) -> int:
    """Largest lane-multiple divisor of n (n is a multiple of 128) that is <= cap."""
    m = n // _LANE
    best = _LANE
    for d in range(1, m + 1):
        t = d * _LANE
        if t > cap:
            break
        if m % d == 0:
            best = t
    return best


class _Plan(NamedTuple):
    mode: str       # "full_k" | "tiled_k" | "k_split"
    dtype: str      # compute dtype (== weight dtype)
    din_pad: int
    dout_pad: int
    tk: int
    tn: int
    n_k: int        # total K tiles
    n_split: int    # K-split factor (k_split only)
    kps: int        # K tiles per split (k_split only)


def _make_plan(din, dout, dtype, n_cores, expected_batch=8,
               force_k_tile=None, force_splits=None) -> _Plan:
    dtype = jnp.dtype(dtype)
    elem = dtype.itemsize
    _, w_budget, x_budget = _hw_budgets()
    b_assumed = _round_up(max(int(expected_batch), _SUBLANE), _SUBLANE)
    din_128 = _round_up(din, _LANE)
    dout_128 = _round_up(dout, _LANE)

    full_k = (force_k_tile is None
              and din_128 * _LANE * elem <= w_budget
              and b_assumed * din_128 * elem <= x_budget)

    if full_k:
        tk = din_128
    elif force_k_tile is not None:
        tk = _round_up(int(force_k_tile), _LANE)
    else:
        max_tk = max(_LANE, min(2048, w_budget // (_LANE * elem)))
        tk = _choose_tile(din_128, max_tk)

    # Grow the lane dim (tn) first: long contiguous DMA rows matter most.
    max_tn = max(_LANE, w_budget // (tk * elem))
    tn = _choose_tile(dout_128, max_tn, prefer_count_multiple=n_cores)

    din_pad = _round_up(din_128, tk)
    dout_pad = _round_up(dout_128, tn)
    n_k = din_pad // tk
    n_j = dout_pad // tn

    mode = "full_k" if full_k else "tiled_k"
    n_split, kps = 1, n_k

    # K-split across TensorCores when a single Dout tile would otherwise pin the
    # whole W stream on one core (v7x / megacore; forced in tests).
    w_bytes = din_128 * dout_128 * elem
    want_split = force_splits if force_splits is not None else (
        n_cores if (n_cores > 1 and w_bytes >= 2 * _MIB) else 1)
    if (n_j == 1 and want_split > 1 and force_k_tile is None
            and din_128 >= want_split * _LANE):
        n_split = int(want_split)
        cap = max(_LANE, min(w_budget // (tn * elem),
                             _round_up(pl.cdiv(din_128, n_split), _LANE)))
        cap = (cap // _LANE) * _LANE
        best = None
        for t in range(cap, _LANE - 1, -_LANE):
            kps_t = pl.cdiv(pl.cdiv(din_128, t), n_split)
            padded = n_split * kps_t * t        # total padded K (extra = wasted W)
            key = (padded, -t)
            if best is None or key < best[0]:
                best = (key, t, kps_t, padded)
        _, tk, kps, din_pad = best
        n_k = n_split * kps
        mode = "k_split"

    return _Plan(mode=mode, dtype=dtype.name, din_pad=int(din_pad),
                 dout_pad=int(dout_pad), tk=int(tk), tn=int(tn),
                 n_k=int(n_k), n_split=int(n_split), kps=int(kps))


def _adjust_plan_for_batch(plan: _Plan, batch: int) -> _Plan:
    """Large-batch guard: if the full-K x slab no longer fits its VMEM budget,
    fall back to K tiles that evenly divide the already-padded Din (so the
    pre-padded W is reused unchanged)."""
    if plan.mode != "full_k":
        return plan
    elem = jnp.dtype(plan.dtype).itemsize
    _, w_budget, x_budget = _hw_budgets()
    b_pad = _round_up(max(batch, _SUBLANE), _SUBLANE)
    if b_pad * plan.din_pad * elem <= x_budget:
        return plan
    cap = min(x_budget // (b_pad * elem), w_budget // (plan.tn * elem))
    tk = _largest_lane_divisor(plan.din_pad, max(_LANE, cap))
    return plan._replace(mode="tiled_k", tk=tk, n_k=plan.din_pad // tk)


# --------------------------------------------------------------------------
# Kernels
# --------------------------------------------------------------------------
def _linop_full_k_kernel(x_ref, w_ref, o_ref, *, precision):
    """Full contraction resident in VMEM: y[:, tn] = x[:, K] @ W[K, tn]."""
    o_ref[...] = jnp.dot(
        x_ref[...], w_ref[...],
        preferred_element_type=jnp.float32, precision=precision,
    ).astype(o_ref.dtype)


def _linop_tiled_k_kernel(x_ref, w_ref, o_ref, acc_ref, *, precision):
    """Tiled contraction: f32 scratch accumulator, store (and cast) at last k."""
    k = pl.program_id(1)

    @pl.when(k == 0)
    def _init():
        acc_ref[...] = jnp.zeros_like(acc_ref)

    acc_ref[...] += jnp.dot(
        x_ref[...], w_ref[...],
        preferred_element_type=jnp.float32, precision=precision)

    @pl.when(k == pl.num_programs(1) - 1)
    def _store():
        o_ref[...] = acc_ref[...].astype(o_ref.dtype)


def _linop_ksplit_kernel(x_ref, w_ref, o_ref, *, precision):
    """Per-split partial sum over a K range; partials combined outside."""
    k = pl.program_id(1)

    @pl.when(k == 0)
    def _init():
        o_ref[...] = jnp.zeros_like(o_ref)

    o_ref[...] += jnp.dot(
        x_ref[...], w_ref[...],
        preferred_element_type=jnp.float32, precision=precision)


# --------------------------------------------------------------------------
# Forward wrapper
# --------------------------------------------------------------------------
@functools.partial(jax.jit, static_argnames=("plan", "oshape", "precision"))
def _linop_apply(x, w_p, *, plan, oshape, precision):
    B = x.shape[0]
    din = math.prod(x.shape[1:])
    dout = math.prod(oshape)
    cdt = jnp.dtype(plan.dtype)
    elem = cdt.itemsize
    vmem_limit, _, _ = _hw_budgets()

    b_pad = _round_up(max(B, _SUBLANE), _SUBLANE)
    # Never upcast W: cast the tiny activation to the weight's dtype instead.
    x2d = x.reshape(B, din).astype(cdt)
    x_p = jnp.pad(x2d, ((0, b_pad - B), (0, plan.din_pad - din)))

    kps = plan.kps
    if plan.mode == "full_k":
        grid = (plan.dout_pad // plan.tn,)
        in_specs = [
            # TODO(synk): x is grid-invariant here; pl.Buffered(1) pipeline_mode
            # would save one x slab of VMEM.
            pl.BlockSpec((b_pad, plan.din_pad), lambda j: (0, 0)),
            pl.BlockSpec((plan.din_pad, plan.tn), lambda j: (0, j)),
        ]
        out_specs = pl.BlockSpec((b_pad, plan.tn), lambda j: (0, j))
        out_shape = jax.ShapeDtypeStruct((b_pad, plan.dout_pad), cdt)
        scratch = []
        kernel = functools.partial(_linop_full_k_kernel, precision=precision)
        dim_sem = ("parallel",)
        out_bytes = b_pad * plan.dout_pad * elem
    elif plan.mode == "tiled_k":
        grid = (plan.dout_pad // plan.tn, plan.n_k)   # reduction axis last
        in_specs = [
            pl.BlockSpec((b_pad, plan.tk), lambda j, k: (0, k)),
            pl.BlockSpec((plan.tk, plan.tn), lambda j, k: (k, j)),
        ]
        out_specs = pl.BlockSpec((b_pad, plan.tn), lambda j, k: (0, j))
        out_shape = jax.ShapeDtypeStruct((b_pad, plan.dout_pad), cdt)
        scratch = [pltpu.VMEM((b_pad, plan.tn), jnp.float32)]
        kernel = functools.partial(_linop_tiled_k_kernel, precision=precision)
        dim_sem = ("parallel", "arbitrary")
        out_bytes = b_pad * plan.dout_pad * elem
    else:  # "k_split": both TensorCores stream disjoint K ranges of W
        grid = (plan.n_split, kps)
        in_specs = [
            pl.BlockSpec((b_pad, plan.tk), lambda s, k: (0, s * kps + k)),
            pl.BlockSpec((plan.tk, plan.tn), lambda s, k: (s * kps + k, 0)),
        ]
        out_specs = pl.BlockSpec((None, b_pad, plan.tn), lambda s, k: (s, 0, 0))
        out_shape = jax.ShapeDtypeStruct(
            (plan.n_split, b_pad, plan.dout_pad), jnp.float32)
        scratch = []
        kernel = functools.partial(_linop_ksplit_kernel, precision=precision)
        dim_sem = ("parallel", "arbitrary")
        out_bytes = plan.n_split * b_pad * plan.dout_pad * 4

    cost = pl.CostEstimate(
        flops=2 * b_pad * plan.din_pad * plan.dout_pad,
        transcendentals=0,
        bytes_accessed=(plan.din_pad * plan.dout_pad * elem     # W (dominant)
                        + b_pad * plan.din_pad * elem           # x
                        + out_bytes),                           # y
    )

    y = pl.pallas_call(
        kernel,
        out_shape=out_shape,
        grid_spec=pltpu.PrefetchScalarGridSpec(
            num_scalar_prefetch=0,
            grid=grid,
            in_specs=in_specs,
            out_specs=out_specs,
            scratch_shapes=scratch,
        ),
        compiler_params=pltpu.CompilerParams(
            dimension_semantics=dim_sem,
            vmem_limit_bytes=vmem_limit,
        ),
        cost_estimate=cost,
    )(x_p, w_p)

    if plan.mode == "k_split":
        y = jnp.sum(y, axis=0).astype(cdt)     # tiny combine of per-core partials

    return y[:B, :dout].reshape((B,) + tuple(oshape))


class PallasLinop:
    """Generic linop: A maps arrays of shape (B, *ishape) -> (B, *oshape)."""

    def __init__(self, ishape, oshape, key, dtype=jnp.float32, *,
                 expected_batch=8, precision=None,
                 force_k_tile=None, force_splits=None):
        self.ishape = tuple(int(d) for d in ishape)
        self.oshape = tuple(int(d) for d in oshape)
        # precision=jax.lax.Precision.HIGHEST gives full-f32 MXU passes if
        # bit-level parity with torch fp32 matmul is required (default keeps
        # the cheaper default MXU precision).
        self.precision = precision
        self._din = math.prod(self.ishape)
        self._dout = math.prod(self.oshape)
        self._dtype = jnp.dtype(dtype)

        # Deterministic synthetic weight (the abstract torch linop carries none).
        w = jax.random.normal(key, (self._din, self._dout), dtype=jnp.float32)
        self.weight = (w / jnp.sqrt(jnp.float32(self._din))).astype(self._dtype)

        self.plan = _make_plan(self._din, self._dout, self._dtype,
                               _num_tensorcores(),
                               expected_batch=expected_batch,
                               force_k_tile=force_k_tile,
                               force_splits=force_splits)
        # Pad (and keep the stored dtype of) W exactly ONCE: W streaming
        # dominates HBM traffic; per-call pad/cast ~3x's the W bytes moved.
        self.weight_padded = jnp.pad(
            self.weight,
            ((0, self.plan.din_pad - self._din),
             (0, self.plan.dout_pad - self._dout)))

    def forward(self, x):
        if math.prod(x.shape[1:]) != self._din:
            raise ValueError(
                f"input {x.shape} incompatible with ishape {self.ishape}")
        plan = _adjust_plan_for_batch(self.plan, x.shape[0])
        return _linop_apply(x, self.weight_padded, plan=plan,
                            oshape=self.oshape, precision=self.precision)

    __call__ = forward


if __name__ == "__main__":
    key = jax.random.PRNGKey(0)
    k_w, k_w2, k_w3, k_x, k_x2, k_x3 = jax.random.split(key, 6)

    B = 2
    ishape = (4, 16, 16)    # prod = 1024
    oshape = (8, 8, 8)      # prod = 512

    # --- case 1: f32, full-K path -------------------------------------------
    A = PallasLinop(ishape, oshape, k_w)
    x = jax.random.normal(k_x, (B,) + ishape, dtype=jnp.float32)
    y = jax.block_until_ready(A(x))
    y_ref = (x.reshape(B, -1) @ A.weight).reshape((B,) + oshape)
    assert y.shape == (B,) + oshape
    assert jnp.allclose(y, y_ref, atol=1e-4, rtol=1e-4)

    # --- case 2: tiled-K path (forced), f32 scratch accumulator --------------
    A_t = PallasLinop(ishape, oshape, k_w, force_k_tile=256)
    assert A_t.plan.mode == "tiled_k"
    y_t = jax.block_until_ready(A_t(x))
    assert jnp.allclose(y_t, y_ref, atol=1e-4, rtol=1e-4)

    # --- case 3: bf16 weights + bf16 activations (halved HBM traffic) --------
    A16 = PallasLinop(ishape, oshape, k_w, dtype=jnp.bfloat16)
    x16 = x.astype(jnp.bfloat16)
    y16 = jax.block_until_ready(A16(x16))
    y16_ref = (x16.astype(jnp.float32).reshape(B, -1)
               @ A16.weight.astype(jnp.float32)).reshape((B,) + oshape)
    assert y16.dtype == jnp.bfloat16
    assert jnp.allclose(y16.astype(jnp.float32), y16_ref, atol=1e-1, rtol=1e-1)

    # --- case 3b: mixed dtypes — W stays bf16 in HBM, x (tiny) is downcast ---
    y16m = jax.block_until_ready(A16(x))            # f32 activations in
    assert y16m.dtype == jnp.bfloat16
    assert jnp.allclose(y16m.astype(jnp.float32), y16_ref, atol=1e-1, rtol=1e-1)

    # --- case 4: ragged, non-divisible shapes (padding path) -----------------
    ishape3 = (3, 5, 7)     # prod = 105
    oshape3 = (6, 11)       # prod = 66
    A3 = PallasLinop(ishape3, oshape3, k_w2)
    x3 = jax.random.normal(k_x2, (B,) + ishape3, dtype=jnp.float32)
    y3 = jax.block_until_ready(A3(x3))
    y3_ref = (x3.reshape(B, -1) @ A3.weight).reshape((B,) + oshape3)
    assert y3.shape == (B,) + oshape3
    assert jnp.allclose(y3, y3_ref, atol=1e-4, rtol=1e-4)

    # --- case 5: K-split path (dual-TensorCore small-Dout case, forced) ------
    ishape5 = (4, 16, 16)   # prod = 1024
    oshape5 = (128,)
    A5 = PallasLinop(ishape5, oshape5, k_w3, force_splits=2)
    assert A5.plan.mode == "k_split"
    x5 = jax.random.normal(k_x3, (B,) + ishape5, dtype=jnp.float32)
    y5 = jax.block_until_ready(A5(x5))
    y5_ref = (x5.reshape(B, -1) @ A5.weight).reshape((B,) + oshape5)
    assert jnp.allclose(y5, y5_ref, atol=1e-4, rtol=1e-4)

    print("KERNEL_OK")
</pallas_src>

<mosaic_0001>
module attributes {stable_mosaic.version = 11 : i64} {
  func.func @_linop_full_k_kernel(%arg0: i32, %arg1: memref<8x1024xf32, #tpu.memory_space<vmem>>, %arg2: memref<1024x512xf32, #tpu.memory_space<vmem>>, %arg3: memref<8x512xf32, #tpu.memory_space<vmem>>) attributes {dimension_semantics = [#tpu.dimension_semantics<parallel>], iteration_bounds = array<i64: 1>, scalar_prefetch = 0 : i64, scratch_operands = 0 : i64, tpu.core_type = #tpu.core_type<tc>, window_params = [{pipeline_mode = #tpu.pipeline_mode<synchronous>, transform_indices = @transform_0, window_bounds = array<i64: 8, 1024>}, {transform_indices = @transform_1, window_bounds = array<i64: 1024, 512>}, {transform_indices = @transform_2, window_bounds = array<i64: 8, 512>}]} {
    %c0 = arith.constant 0 : index
    %c0_0 = arith.constant 0 : index
    %0 = vector.load %arg1[%c0, %c0_0] : memref<8x1024xf32, #tpu.memory_space<vmem>>, vector<8x1024xf32>
    %c0_1 = arith.constant 0 : index
    %c0_2 = arith.constant 0 : index
    %1 = vector.load %arg2[%c0_1, %c0_2] : memref<1024x512xf32, #tpu.memory_space<vmem>>, vector<1024x512xf32>
    %cst = arith.constant dense<0.000000e+00> : vector<8x512xf32>
    %2 = tpu.matmul %0, %1, %cst {dimension_numbers = #tpu.dot_dimension_numbers<[1], [0], [0], [1], [0, 0, 1, 1], [], []>} : vector<8x1024xf32>, vector<1024x512xf32>, vector<8x512xf32> -> vector<8x512xf32>
    %c0_3 = arith.constant 0 : index
    %c0_4 = arith.constant 0 : index
    %3 = vector.load %arg3[%c0_3, %c0_4] : memref<8x512xf32, #tpu.memory_space<vmem>>, vector<8x512xf32>
    tpu.vector_store %arg3[%c0_3, %c0_4], %2 {strides = array<i32>} : memref<8x512xf32, #tpu.memory_space<vmem>>, vector<8x512xf32>,
    return
  }
  func.func @transform_0(%arg0: i32) -> (i32, i32) {
    %c0_i32 = arith.constant 0 : i32
    %c0_i32_0 = arith.constant 0 : i32
    %c0_i32_1 = arith.constant 0 : i32
    return %c0_i32, %c0_i32_0 : i32, i32
  }
  func.func @transform_1(%arg0: i32) -> (i32, i32) {
    %c0_i32 = arith.constant 0 : i32
    %c0_i32_0 = arith.constant 0 : i32
    return %c0_i32, %arg0 : i32, i32
  }
  func.func @transform_2(%arg0: i32) -> (i32, i32) {
    %c0_i32 = arith.constant 0 : i32
    %c0_i32_0 = arith.constant 0 : i32
    return %c0_i32, %arg0 : i32, i32
  }
}

</mosaic_0001>

<llo_original>
// kernel: _linop_apply.1
$region0: #{_linop_apply.1}
  #allocation0 [shape = 'u32[]', space=smem, size = 0x4, offset = 0x4, fixed_abs, tag = 'smem constant byte address 0x4 - core index']
  #allocation1 [shape = 'u32[72,128]{1,0:T(1,128)}', space=vmem, size = 0x9000, scoped, tag = 'internal scratch']
  %s0 = inlined_call_operand.vmem [shape: f32[8,1024], index: 0, kind: input, shape index: {}]
  %s1 = inlined_call_operand.hbm [shape: f32[1024,512], index: 1, kind: input, shape index: {}]
  %s2 = inlined_call_operand.vmem [shape: f32[8,512], index: 2, kind: output, shape index: {}]
  %s3 = sld [smem:[#allocation0]]
  $region22: #{_linop_apply.1} parent=0
    _
  %s5 = ssub.s32 1, %s3
  %s6 = scalar_select 0, %s5, %s3
  $region1: #{_linop_apply.1} parent=0
    #allocation2 [shape = 'u8[2097152]{0}', space=vmem, size = 0x200000, scoped, tag = 'input window, operand 1, single buffered']
    #allocation3 [shape = 's32[1]{0}', space=sflag, size = 0x4, scoped, tag = 'scoped memory for _linop_apply.1']
    %7 = vsyncpa [#allocation3], 0
    // Predicated region
    $region2: #{_linop_apply.1} parent=1 // pred_check
      _
    $region3: #{_linop_apply.1} parent=1 // pred_check_branch
      %9 = sbr.rel (0) target = $region5
    $region4: #{_linop_apply.1} parent=1 // pred_region
      _
    $region5: #{_linop_apply.1} parent=1 // pred_fallthru
      _
    // Predicated region
    $region6: #{_linop_apply.1} parent=1 // pred_check
      _
    $region7: #{_linop_apply.1} parent=1 // pred_check_branch
      %11 = sbr.rel (0) target = $region9
    $region8: #{_linop_apply.1} parent=1 // pred_region
      %13 = vsyncadd [#allocation3], 0
      %s14 = sshll.u32 %s1, 4
      %s15 = int_to_ptr.hbm [resolvable:$true] %s14
      %s16 = sshll.u32 [#allocation2], 4
      %s17 = int_to_ptr.vmem [resolvable:$true] %s16
      %22 = dma.hbm_to_vmem [thread:$0]  %s15, 65536, %s17, [#allocation3], 512, 512, 32
    $region9: #{_linop_apply.1} parent=1 // pred_fallthru
      _
    // Predicated region
    $region10: #{_linop_apply.1} parent=1 // pred_check
      _
    $region11: #{_linop_apply.1} parent=1 // pred_check_branch
      %24 = sbr.rel (0) target = $region13
    $region12: #{_linop_apply.1} parent=1 // pred_region
      %26 = dma.done [#allocation3], 65536
    $region13: #{_linop_apply.1} parent=1 // pred_fallthru
      _
    %v27 = vld [vmem:[%s0] sm:$0xff]
    %v28 = vld [vmem:[%s0 + $0x8] sm:$0xff]
    %v29 = vld [vmem:[%s0 + $0x10] sm:$0xff]
    %v30 = vld [vmem:[%s0 + $0x18] sm:$0xff]
    %v31 = vld [vmem:[%s0 + $0x20] sm:$0xff]
    %v32 = vld [vmem:[%s0 + $0x28] sm:$0xff]
    %v33 = vld [vmem:[%s0 + $0x30] sm:$0xff]
    %v34 = vld [vmem:[%s0 + $0x38] sm:$0xff]
    %v35 = vld [vmem:[#allocation2] sm:$0xff]
    %v36 = vld [vmem:[#allocation2 + $0x8] sm:$0xff]
    %v37 = vld [vmem:[#allocation2 + $0x10] sm:$0xff]
    %v38 = vld [vmem:[#allocation2 + $0x18] sm:$0xff]
    %v39 = vld [vmem:[#allocation2 + $0x20] sm:$0xff]
    %v40 = vld [vmem:[#allocation2 + $0x28] sm:$0xff]
    %v41 = vld [vmem:[#allocation2 + $0x30] sm:$0xff]
    %v42 = vld [vmem:[#allocation2 + $0x38] sm:$0xff]
    %v43 = vld [vmem:[#allocation2 + $0x40] sm:$0xff]
    %v44 = vld [vmem:[#allocation2 + $0x48] sm:$0xff]
    %v45 = vld [vmem:[#allocation2 + $0x50] sm:$0xff]
    %v46 = vld [vmem:[#allocation2 + $0x58] sm:$0xff]
    %v47 = vld [vmem:[#allocation2 + $0x60] sm:$0xff]
    %v48 = vld [vmem:[#allocation2 + $0x68] sm:$0xff]
    %v49 = vld [vmem:[#allocation2 + $0x70] sm:$0xff]
    %v50 = vld [vmem:[#allocation2 + $0x78] sm:$0xff]
    %v51 = vld [vmem:[#allocation2 + $0x80] sm:$0xff]
    %v52 = vld [vmem:[#allocation2 + $0x88] sm:$0xff]
    %v53 = vld [vmem:[#allocation2 + $0x90] sm:$0xff]
    %v54 = vld [vmem:[#allocation2 + $0x98] sm:$0xff]
    %v55 = vld [vmem:[#allocation2 + $0xa0] sm:$0xff]
    %v56 = vld [vmem:[#allocation2 + $0xa8] sm:$0xff]
    %v57 = vld [vmem:[#allocation2 + $0xb0] sm:$0xff]
    %v58 = vld [vmem:[#allocation2 + $0xb8] sm:$0xff]
    %v59 = vld [vmem:[#allocation2 + $0xc0] sm:$0xff]
    %v60 = vld [vmem:[#allocation2 + $0xc8] sm:$0xff]
    %v61 = vld [vmem:[#allocation2 + $0xd0] sm:$0xff]
    %v62 = vld [vmem:[#allocation2 + $0xd8] sm:$0xff]
    %v63 = vld [vmem:[#allocation2 + $0xe0] sm:$0xff]
    %v64 = vld [vmem:[#allocation2 + $0xe8] sm:$0xff]
    %v65 = vld [vmem:[#allocation2 + $0xf0] sm:$0xff]
    %v66 = vld [vmem:[#allocation2 + $0xf8] sm:$0xff]
    %v67 = vld [vmem:[#allocation2 + $0x100] sm:$0xff]
    %v68 = vld [vmem:[#allocation2 + $0x108] sm:$0xff]
    %v69 = vld [vmem:[#allocation2 + $0x110] sm:$0xff]
    %v70 = vld [vmem:[#allocation2 + $0x118] sm:$0xff]
    %v71 = vld [vmem:[#allocation2 + $0x120] sm:$0xff]
    %v72 = vld [vmem:[#allocation2 + $0x128] sm:$0xff]
    %v73 = vld [vmem:[#allocation2 + $0x130] sm:$0xff]
    %v74 = vld [vmem:[#allocation2 + $0x138] sm:$0xff]
    %v75 = vld [vmem:[#allocation2 + $0x140] sm:$0xff]
    %v76 = vld [vmem:[#allocation2 + $0x148] sm:$0xff]
    %v77 = vld [vmem:[#allocation2 + $0x150] sm:$0xff]
    %v78 = vld [vmem:[#allocation2 + $0x158] sm:$0xff]
    %v79 = vld [vmem:[#allocation2 + $0x160] sm:$0xff]
    %v80 = vld [vmem:[#allocation2 + $0x168] sm:$0xff]
    %v81 = vld [vmem:[#allocation2 + $0x170] sm:$0xff]
    %v82 = vld [vmem:[#allocation2 + $0x178] sm:$0xff]
    %v83 = vld [vmem:[#allocation2 + $0x180] sm:$0xff]
    %v84 = vld [vmem:[#allocation2 + $0x188] sm:$0xff]
    %v85 = vld [vmem:[#allocation2 + $0x190] sm:$0xff]
    %v86 = vld [vmem:[#allocation2 + $0x198] sm:$0xff]
    %v87 = vld [vmem:[#allocation2 + $0x1a0] sm:$0xff]
    %v88 = vld [vmem:[#allocation2 + $0x1a8] sm:$0xff]
    %v89 = vld [vmem:[#allocation2 + $0x1b0] sm:$0xff]
    %v90 = vld [vmem:[#allocation2 + $0x1b8] sm:$0xff]
    %v91 = vld [vmem:[#allocation2 + $0x1c0] sm:$0xff]
    %v92 = vld [vmem:[#allocation2 + $0x1c8] sm:$0xff]
    %v93 = vld [vmem:[#allocation2 + $0x1d0] sm:$0xff]
    %v94 = vld [vmem:[#allocation2 + $0x1d8] sm:$0xff]
    %v95 = vld [vmem:[#allocation2 + $0x1e0] sm:$0xff]
    %v96 = vld [vmem:[#allocation2 + $0x1e8] sm:$0xff]
    %v97 = vld [vmem:[#allocation2 + $0x1f0] sm:$0xff]
    %v98 = vld [vmem:[#allocation2 + $0x1f8] sm:$0xff]
    %v99 = vld [vmem:[#allocation2 + $0x200] sm:$0xff]
    %v100 = vld [vmem:[#allocation2 + $0x208] sm:$0xff]
    %v101 = vld [vmem:[#allocation2 + $0x210] sm:$0xff]
    %v102 = vld [vmem:[#allocation2 + $0x218] sm:$0xff]
    %v103 = vld [vmem:[#allocation2 + $0x220] sm:$0xff]
    %v104 = vld [vmem:[#allocation2 + $0x228] sm:$0xff]
    %v105 = vld [vmem:[#allocation2 + $0x230] sm:$0xff]
    %v106 = vld [vmem:[#allocation2 + $0x238] sm:$0xff]
    %v107 = vld [vmem:[#allocation2 + $0x240] sm:$0xff]
    %v108 = vld [vmem:[#allocation2 + $0x248] sm:$0xff]
    %v109 = vld [vmem:[#allocation2 + $0x250] sm:$0xff]
    %v110 = vld [vmem:[#allocation2 + $0x258] sm:$0xff]
    %v111 = vld [vmem:[#allocation2 + $0x260] sm:$0xff]
    %v112 = vld [vmem:[#allocation2 + $0x268] sm:$0xff]
    %v113 = vld [vmem:[#allocation2 + $0x270] sm:$0xff]
    %v114 = vld [vmem:[#allocation2 + $0x278] sm:$0xff]
    %v115 = vld [vmem:[#allocation2 + $0x280] sm:$0xff]
    %v116 = vld [vmem:[#allocation2 + $0x288] sm:$0xff]
    %v117 = vld [vmem:[#allocation2 + $0x290] sm:$0xff]
    %v118 = vld [vmem:[#allocation2 + $0x298] sm:$0xff]
    %v119 = vld [vmem:[#allocation2 + $0x2a0] sm:$0xff]
    %v120 = vld [vmem:[#allocation2 + $0x2a8] sm:$0xff]
    %v121 = vld [vmem:[#allocation2 + $0x2b0] sm:$0xff]
    %v122 = vld [vmem:[#allocation2 + $0x2b8] sm:$0xff]
    %v123 = vld [vmem:[#allocation2 + $0x2c0] sm:$0xff]
    %v124 = vld [vmem:[#allocation2 + $0x2c8] sm:$0xff]
    %v125 = vld [vmem:[#allocation2 + $0x2d0] sm:$0xff]
    %v126 = vld [vmem:[#allocation2 + $0x2d8] sm:$0xff]
    %v127 = vld [vmem:[#allocation2 + $0x2e0] sm:$0xff]
    %v128 = vld [vmem:[#allocation2 + $0x2e8] sm:$0xff]
    %v129 = vld [vmem:[#allocation2 + $0x2f0] sm:$0xff]
    %v130 = vld [vmem:[#allocation2 + $0x2f8] sm:$0xff]
    %v131 = vld [vmem:[#allocation2 + $0x300] sm:$0xff]
    %v132 = vld [vmem:[#allocation2 + $0x308] sm:$0xff]
    %v133 = vld [vmem:[#allocation2 + $0x310] sm:$0xff]
    %v134 = vld [vmem:[#allocation2 + $0x318] sm:$0xff]
    %v135 = vld [vmem:[#allocation2 + $0x320] sm:$0xff]
    %v136 = vld [vmem:[#allocation2 + $0x328] sm:$0xff]
    %v137 = vld [vmem:[#allocation2 + $0x330] sm:$0xff]
    %v138 = vld [vmem:[#allocation2 + $0x338] sm:$0xff]
    %v139 = vld [vmem:[#allocation2 + $0x340] sm:$0xff]
    %v140 = vld [vmem:[#allocation2 + $0x348] sm:$0xff]
    %v141 = vld [vmem:[#allocation2 + $0x350] sm:$0xff]
    %v142 = vld [vmem:[#allocation2 + $0x358] sm:$0xff]
    %v143 = vld [vmem:[#allocation2 + $0x360] sm:$0xff]
    %v144 = vld [vmem:[#allocation2 + $0x368] sm:$0xff]
    %v145 = vld [vmem:[#allocation2 + $0x370] sm:$0xff]
    %v146 = vld [vmem:[#allocation2 + $0x378] sm:$0xff]
    %v147 = vld [vmem:[#allocation2 + $0x380] sm:$0xff]
    %v148 = vld [vmem:[#allocation2 + $0x388] sm:$0xff]
    %v149 = vld [vmem:[#allocation2 + $0x390] sm:$0xff]
    %v150 = vld [vmem:[#allocation2 + $0x398] sm:$0xff]
    %v151 = vld [vmem:[#allocation2 + $0x3a0] sm:$0xff]
    %v152 = vld [vmem:[#allocation2 + $0x3a8] sm:$0xff]
    %v153 = vld [vmem:[#allocation2 + $0x3b0] sm:$0xff]
    %v154 = vld [vmem:[#allocation2 + $0x3b8] sm:$0xff]
    %v155 = vld [vmem:[#allocation2 + $0x3c0] sm:$0xff]
    %v156 = vld [vmem:[#allocation2 + $0x3c8] sm:$0xff]
    %v157 = vld [vmem:[#allocation2 + $0x3d0] sm:$0xff]
    %v158 = vld [vmem:[#allocation2 + $0x3d8] sm:$0xff]
    %v159 = vld [vmem:[#allocation2 + $0x3e0] sm:$0xff]
    %v160 = vld [vmem:[#allocation2 + $0x3e8] sm:$0xff]
    %v161 = vld [vmem:[#allocation2 + $0x3f0] sm:$0xff]
    %v162 = vld [vmem:[#allocation2 + $0x3f8] sm:$0xff]
    %v163 = vld [vmem:[#allocation2 + $0x400] sm:$0xff]
    %v164 = vld [vmem:[#allocation2 + $0x408] sm:$0xff]
    %v165 = vld [vmem:[#allocation2 + $0x410] sm:$0xff]
    %v166 = vld [vmem:[#allocation2 + $0x418] sm:$0xff]
    %v167 = vld [vmem:[#allocation2 + $0x420] sm:$0xff]
    %v168 = vld [vmem:[#allocation2 + $0x428] sm:$0xff]
    %v169 = vld [vmem:[#allocation2 + $0x430] sm:$0xff]
    %v170 = vld [vmem:[#allocation2 + $0x438] sm:$0xff]
    %v171 = vld [vmem:[#allocation2 + $0x440] sm:$0xff]
    %v172 = vld [vmem:[#allocation2 + $0x448] sm:$0xff]
    %v173 = vld [vmem:[#allocation2 + $0x450] sm:$0xff]
    %v174 = vld [vmem:[#allocation2 + $0x458] sm:$0xff]
    %v175 = vld [vmem:[#allocation2 + $0x460] sm:$0xff]
    %v176 = vld [vmem:[#allocation2 + $0x468] sm:$0xff]
    %v177 = vld [vmem:[#allocation2 + $0x470] sm:$0xff]
    %v178 = vld [vmem:[#allocation2 + $0x478] sm:$0xff]
    %v179 = vld [vmem:[#allocation2 + $0x480] sm:$0xff]
    %v180 = vld [vmem:[#allocation2 + $0x488] sm:$0xff]
    %v181 = vld [vmem:[#allocation2 + $0x490] sm:$0xff]
    %v182 = vld [vmem:[#allocation2 + $0x498] sm:$0xff]
    %v183 = vld [vmem:[#allocation2 + $0x4a0] sm:$0xff]
    %v184 = vld [vmem:[#allocation2 + $0x4a8] sm:$0xff]
    %v185 = vld [vmem:[#allocation2 + $0x4b0] sm:$0xff]
    %v186 = vld [vmem:[#allocation2 + $0x4b8] sm:$0xff]
    %v187 = vld [vmem:[#allocation2 + $0x4c0] sm:$0xff]
    %v188 = vld [vmem:[#allocation2 + $0x4c8] sm:$0xff]
    %v189 = vld [vmem:[#allocation2 + $0x4d0] sm:$0xff]
    %v190 = vld [vmem:[#allocation2 + $0x4d8] sm:$0xff]
    %v191 = vld [vmem:[#allocation2 + $0x4e0] sm:$0xff]
    %v192 = vld [vmem:[#allocation2 + $0x4e8] sm:$0xff]
    %v193 = vld [vmem:[#allocation2 + $0x4f0] sm:$0xff]
    %v194 = vld [vmem:[#allocation2 + $0x4f8] sm:$0xff]
    %v195 = vld [vmem:[#allocation2 + $0x500] sm:$0xff]
    %v196 = vld [vmem:[#allocation2 + $0x508] sm:$0xff]
    %v197 = vld [vmem:[#allocation2 + $0x510] sm:$0xff]
    %v198 = vld [vmem:[#allocation2 + $0x518] sm:$0xff]
    %v199 = vld [vmem:[#allocation2 + $0x520] sm:$0xff]
    %v200 = vld [vmem:[#allocation2 + $0x528] sm:$0xff]
    %v201 = vld [vmem:[#allocation2 + $0x530] sm:$0xff]
    %v202 = vld [vmem:[#allocation2 + $0x538] sm:$0xff]
    %v203 = vld [vmem:[#allocation2 + $0x540] sm:$0xff]
    %v204 = vld [vmem:[#allocation2 + $0x548] sm:$0xff]
    %v205 = vld [vmem:[#allocation2 + $0x550] sm:$0xff]
    %v206 = vld [vmem:[#allocation2 + $0x558] sm:$0xff]
    %v207 = vld [vmem:[#allocation2 + $0x560] sm:$0xff]
    %v208 = vld [vmem:[#allocation2 + $0x568] sm:$0xff]
    %v209 = vld [vmem:[#allocation2 + $0x570] sm:$0xff]
    %v210 = vld [vmem:[#allocation2 + $0x578] sm:$0xff]
    %v211 = vld [vmem:[#allocation2 + $0x580] sm:$0xff]
    %v212 = vld [vmem:[#allocation2 + $0x588] sm:$0xff]
    %v213 = vld [vmem:[#allocation2 + $0x590] sm:$0xff]
    %v214 = vld [vmem:[#allocation2 + $0x598] sm:$0xff]
    %v215 = vld [vmem:[#allocation2 + $0x5a0] sm:$0xff]
    %v216 = vld [vmem:[#allocation2 + $0x5a8] sm:$0xff]
    %v217 = vld [vmem:[#allocation2 + $0x5b0] sm:$0xff]
    %v218 = vld [vmem:[#allocation2 + $0x5b8] sm:$0xff]
    %v219 = vld [vmem:[#allocation2 + $0x5c0] sm:$0xff]
    %v220 = vld [vmem:[#allocation2 + $0x5c8] sm:$0xff]
    %v221 = vld [vmem:[#allocation2 + $0x5d0] sm:$0xff]
    %v222 = vld [vmem:[#allocation2 + $0x5d8] sm:$0xff]
    %v223 = vld [vmem:[#allocation2 + $0x5e0] sm:$0xff]
    %v224 = vld [vmem:[#allocation2 + $0x5e8] sm:$0xff]
    %v225 = vld [vmem:[#allocation2 + $0x5f0] sm:$0xff]
    %v226 = vld [vmem:[#allocation2 + $0x5f8] sm:$0xff]
    %v227 = vld [vmem:[#allocation2 + $0x600] sm:$0xff]
    %v228 = vld [vmem:[#allocation2 + $0x608] sm:$0xff]
    %v229 = vld [vmem:[#allocation2 + $0x610] sm:$0xff]
    %v230 = vld [vmem:[#allocation2 + $0x618] sm:$0xff]
    %v231 = vld [vmem:[#allocation2 + $0x620] sm:$0xff]
    %v232 = vld [vmem:[#allocation2 + $0x628] sm:$0xff]
    %v233 = vld [vmem:[#allocation2 + $0x630] sm:$0xff]
    %v234 = vld [vmem:[#allocation2 + $0x638] sm:$0xff]
    %v235 = vld [vmem:[#allocation2 + $0x640] sm:$0xff]
    %v236 = vld [vmem:[#allocation2 + $0x648] sm:$0xff]
    %v237 = vld [vmem:[#allocation2 + $0x650] sm:$0xff]
    %v238 = vld [vmem:[#allocation2 + $0x658] sm:$0xff]
    %v239 = vld [vmem:[#allocation2 + $0x660] sm:$0xff]
    %v240 = vld [vmem:[#allocation2 + $0x668] sm:$0xff]
    %v241 = vld [vmem:[#allocation2 + $0x670] sm:$0xff]
    %v242 = vld [vmem:[#allocation2 + $0x678] sm:$0xff]
    %v243 = vld [vmem:[#allocation2 + $0x680] sm:$0xff]
    %v244 = vld [vmem:[#allocation2 + $0x688] sm:$0xff]
    %v245 = vld [vmem:[#allocation2 + $0x690] sm:$0xff]
    %v246 = vld [vmem:[#allocation2 + $0x698] sm:$0xff]
    %v247 = vld [vmem:[#allocation2 + $0x6a0] sm:$0xff]
    %v248 = vld [vmem:[#allocation2 + $0x6a8] sm:$0xff]
    %v249 = vld [vmem:[#allocation2 + $0x6b0] sm:$0xff]
    %v250 = vld [vmem:[#allocation2 + $0x6b8] sm:$0xff]
    %v251 = vld [vmem:[#allocation2 + $0x6c0] sm:$0xff]
    %v252 = vld [vmem:[#allocation2 + $0x6c8] sm:$0xff]
    %v253 = vld [vmem:[#allocation2 + $0x6d0] sm:$0xff]
    %v254 = vld [vmem:[#allocation2 + $0x6d8] sm:$0xff]
    %v255 = vld [vmem:[#allocation2 + $0x6e0] sm:$0xff]
    %v256 = vld [vmem:[#allocation2 + $0x6e8] sm:$0xff]
    %v257 = vld [vmem:[#allocation2 + $0x6f0] sm:$0xff]
    %v258 = vld [vmem:[#allocation2 + $0x6f8] sm:$0xff]
    %v259 = vld [vmem:[#allocation2 + $0x700] sm:$0xff]
    %v260 = vld [vmem:[#allocation2 + $0x708] sm:$0xff]
    %v261 = vld [vmem:[#allocation2 + $0x710] sm:$0xff]
    %v262 = vld [vmem:[#allocation2 + $0x718] sm:$0xff]
    %v263 = vld [vmem:[#allocation2 + $0x720] sm:$0xff]
    %v264 = vld [vmem:[#allocation2 + $0x728] sm:$0xff]
    %v265 = vld [vmem:[#allocation2 + $0x730] sm:$0xff]
    %v266 = vld [vmem:[#allocation2 + $0x738] sm:$0xff]
    %v267 = vld [vmem:[#allocation2 + $0x740] sm:$0xff]
    %v268 = vld [vmem:[#allocation2 + $0x748] sm:$0xff]
    %v269 = vld [vmem:[#allocation2 + $0x750] sm:$0xff]
    %v270 = vld [vmem:[#allocation2 + $0x758] sm:$0xff]
    %v271 = vld [vmem:[#allocation2 + $0x760] sm:$0xff]
    %v272 = vld [vmem:[#allocation2 + $0x768] sm:$0xff]
    %v273 = vld [vmem:[#allocation2 + $0x770] sm:$0xff]
    %v274 = vld [vmem:[#allocation2 + $0x778] sm:$0xff]
    %v275 = vld [vmem:[#allocation2 + $0x780] sm:$0xff]
    %v276 = vld [vmem:[#allocation2 + $0x788] sm:$0xff]
    %v277 = vld [vmem:[#allocation2 + $0x790] sm:$0xff]
    %v278 = vld [vmem:[#allocation2 + $0x798] sm:$0xff]
    %v279 = vld [vmem:[#allocation2 + $0x7a0] sm:$0xff]
    %v280 = vld [vmem:[#allocation2 + $0x7a8] sm:$0xff]
    %v281 = vld [vmem:[#allocation2 + $0x7b0] sm:$0xff]
    %v282 = vld [vmem:[#allocation2 + $0x7b8] sm:$0xff]
    %v283 = vld [vmem:[#allocation2 + $0x7c0] sm:$0xff]
    %v284 = vld [vmem:[#allocation2 + $0x7c8] sm:$0xff]
    %v285 = vld [vmem:[#allocation2 + $0x7d0] sm:$0xff]
    %v286 = vld [vmem:[#allocation2 + $0x7d8] sm:$0xff]
    %v287 = vld [vmem:[#allocation2 + $0x7e0] sm:$0xff]
    %v288 = vld [vmem:[#allocation2 + $0x7e8] sm:$0xff]
    %v289 = vld [vmem:[#allocation2 + $0x7f0] sm:$0xff]
    %v290 = vld [vmem:[#allocation2 + $0x7f8] sm:$0xff]
    %v291 = vld [vmem:[#allocation2 + $0x800] sm:$0xff]
    %v292 = vld [vmem:[#allocation2 + $0x808] sm:$0xff]
    %v293 = vld [vmem:[#allocation2 + $0x810] sm:$0xff]
    %v294 = vld [vmem:[#allocation2 + $0x818] sm:$0xff]
    %v295 = vld [vmem:[#allocation2 + $0x820] sm:$0xff]
    %v296 = vld [vmem:[#allocation2 + $0x828] sm:$0xff]
    %v297 = vld [vmem:[#allocation2 + $0x830] sm:$0xff]
    %v298 = vld [vmem:[#allocation2 + $0x838] sm:$0xff]
    %v299 = vld [vmem:[#allocation2 + $0x840] sm:$0xff]
    %v300 = vld [vmem:[#allocation2 + $0x848] sm:$0xff]
    %v301 = vld [vmem:[#allocation2 + $0x850] sm:$0xff]
    %v302 = vld [vmem:[#allocation2 + $0x858] sm:$0xff]
    %v303 = vld [vmem:[#allocation2 + $0x860] sm:$0xff]
    %v304 = vld [vmem:[#allocation2 + $0x868] sm:$0xff]
    %v305 = vld [vmem:[#allocation2 + $0x870] sm:$0xff]
    %v306 = vld [vmem:[#allocation2 + $0x878] sm:$0xff]
    %v307 = vld [vmem:[#allocation2 + $0x880] sm:$0xff]
    %v308 = vld [vmem:[#allocation2 + $0x888] sm:$0xff]
    %v309 = vld [vmem:[#allocation2 + $0x890] sm:$0xff]
    %v310 = vld [vmem:[#allocation2 + $0x898] sm:$0xff]
    %v311 = vld [vmem:[#allocation2 + $0x8a0] sm:$0xff]
    %v312 = vld [vmem:[#allocation2 + $0x8a8] sm:$0xff]
    %v313 = vld [vmem:[#allocation2 + $0x8b0] sm:$0xff]
    %v314 = vld [vmem:[#allocation2 + $0x8b8] sm:$0xff]
    %v315 = vld [vmem:[#allocation2 + $0x8c0] sm:$0xff]
    %v316 = vld [vmem:[#allocation2 + $0x8c8] sm:$0xff]
    %v317 = vld [vmem:[#allocation2 + $0x8d0] sm:$0xff]
    %v318 = vld [vmem:[#allocation2 + $0x8d8] sm:$0xff]
    %v319 = vld [vmem:[#allocation2 + $0x8e0] sm:$0xff]
    %v320 = vld [vmem:[#allocation2 + $0x8e8] sm:$0xff]
    %v321 = vld [vmem:[#allocation2 + $0x8f0] sm:$0xff]
    %v322 = vld [vmem:[#allocation2 + $0x8f8] sm:$0xff]
    %v323 = vld [vmem:[#allocation2 + $0x900] sm:$0xff]
    %v324 = vld [vmem:[#allocation2 + $0x908] sm:$0xff]
    %v325 = vld [vmem:[#allocation2 + $0x910] sm:$0xff]
    %v326 = vld [vmem:[#allocation2 + $0x918] sm:$0xff]
    %v327 = vld [vmem:[#allocation2 + $0x920] sm:$0xff]
    %v328 = vld [vmem:[#allocation2 + $0x928] sm:$0xff]
    %v329 = vld [vmem:[#allocation2 + $0x930] sm:$0xff]
    %v330 = vld [vmem:[#allocation2 + $0x938] sm:$0xff]
    %v331 = vld [vmem:[#allocation2 + $0x940] sm:$0xff]
    %v332 = vld [vmem:[#allocation2 + $0x948] sm:$0xff]
    %v333 = vld [vmem:[#allocation2 + $0x950] sm:$0xff]
    %v334 = vld [vmem:[#allocation2 + $0x958] sm:$0xff]
    %v335 = vld [vmem:[#allocation2 + $0x960] sm:$0xff]
    %v336 = vld [vmem:[#allocation2 + $0x968] sm:$0xff]
    %v337 = vld [vmem:[#allocation2 + $0x970] sm:$0xff]
    %v338 = vld [vmem:[#allocation2 + $0x978] sm:$0xff]
    %v339 = vld [vmem:[#allocation2 + $0x980] sm:$0xff]
    %v340 = vld [vmem:[#allocation2 + $0x988] sm:$0xff]
    %v341 = vld [vmem:[#allocation2 + $0x990] sm:$0xff]
    %v342 = vld [vmem:[#allocation2 + $0x998] sm:$0xff]
    %v343 = vld [vmem:[#allocation2 + $0x9a0] sm:$0xff]
    %v344 = vld [vmem:[#allocation2 + $0x9a8] sm:$0xff]
    %v345 = vld [vmem:[#allocation2 + $0x9b0] sm:$0xff]
    %v346 = vld [vmem:[#allocation2 + $0x9b8] sm:$0xff]
    %v347 = vld [vmem:[#allocation2 + $0x9c0] sm:$0xff]
    %v348 = vld [vmem:[#allocation2 + $0x9c8] sm:$0xff]
    %v349 = vld [vmem:[#allocation2 + $0x9d0] sm:$0xff]
    %v350 = vld [vmem:[#allocation2 + $0x9d8] sm:$0xff]
    %v351 = vld [vmem:[#allocation2 + $0x9e0] sm:$0xff]
    %v352 = vld [vmem:[#allocation2 + $0x9e8] sm:$0xff]
    %v353 = vld [vmem:[#allocation2 + $0x9f0] sm:$0xff]
    %v354 = vld [vmem:[#allocation2 + $0x9f8] sm:$0xff]
    %v355 = vld [vmem:[#allocation2 + $0xa00] sm:$0xff]
    %v356 = vld [vmem:[#allocation2 + $0xa08] sm:$0xff]
    %v357 = vld [vmem:[#allocation2 + $0xa10] sm:$0xff]
    %v358 = vld [vmem:[#allocation2 + $0xa18] sm:$0xff]
    %v359 = vld [vmem:[#allocation2 + $0xa20] sm:$0xff]
    %v360 = vld [vmem:[#allocation2 + $0xa28] sm:$0xff]
    %v361 = vld [vmem:[#allocation2 + $0xa30] sm:$0xff]
    %v362 = vld [vmem:[#allocation2 + $0xa38] sm:$0xff]
    %v363 = vld [vmem:[#allocation2 + $0xa40] sm:$0xff]
    %v364 = vld [vmem:[#allocation2 + $0xa48] sm:$0xff]
    %v365 = vld [vmem:[#allocation2 + $0xa50] sm:$0xff]
    %v366 = vld [vmem:[#allocation2 + $0xa58] sm:$0xff]
    %v367 = vld [vmem:[#allocation2 + $0xa60] sm:$0xff]
    %v368 = vld [vmem:[#allocation2 + $0xa68] sm:$0xff]
    %v369 = vld [vmem:[#allocation2 + $0xa70] sm:$0xff]
    %v370 = vld [vmem:[#allocation2 + $0xa78] sm:$0xff]
    %v371 = vld [vmem:[#allocation2 + $0xa80] sm:$0xff]
    %v372 = vld [vmem:[#allocation2 + $0xa88] sm:$0xff]
    %v373 = vld [vmem:[#allocation2 + $0xa90] sm:$0xff]
    %v374 = vld [vmem:[#allocation2 + $0xa98] sm:$0xff]
    %v375 = vld [vmem:[#allocation2 + $0xaa0] sm:$0xff]
    %v376 = vld [vmem:[#allocation2 + $0xaa8] sm:$0xff]
    %v377 = vld [vmem:[#allocation2 + $0xab0] sm:$0xff]
    %v378 = vld [vmem:[#allocation2 + $0xab8] sm:$0xff]
    %v379 = vld [vmem:[#allocation2 + $0xac0] sm:$0xff]
    %v380 = vld [vmem:[#allocation2 + $0xac8] sm:$0xff]
    %v381 = vld [vmem:[#allocation2 + $0xad0] sm:$0xff]
    %v382 = vld [vmem:[#allocation2 + $0xad8] sm:$0xff]
    %v383 = vld [vmem:[#allocation2 + $0xae0] sm:$0xff]
    %v384 = vld [vmem:[#allocation2 + $0xae8] sm:$0xff]
    %v385 = vld [vmem:[#allocation2 + $0xaf0] sm:$0xff]
    %v386 = vld [vmem:[#allocation2 + $0xaf8] sm:$0xff]
    %v387 = vld [vmem:[#allocation2 + $0xb00] sm:$0xff]
    %v388 = vld [vmem:[#allocation2 + $0xb08] sm:$0xff]
    %v389 = vld [vmem:[#allocation2 + $0xb10] sm:$0xff]
    %v390 = vld [vmem:[#allocation2 + $0xb18] sm:$0xff]
    %v391 = vld [vmem:[#allocation2 + $0xb20] sm:$0xff]
    %v392 = vld [vmem:[#allocation2 + $0xb28] sm:$0xff]
    %v393 = vld [vmem:[#allocation2 + $0xb30] sm:$0xff]
    %v394 = vld [vmem:[#allocation2 + $0xb38] sm:$0xff]
    %v395 = vld [vmem:[#allocation2 + $0xb40] sm:$0xff]
    %v396 = vld [vmem:[#allocation2 + $0xb48] sm:$0xff]
    %v397 = vld [vmem:[#allocation2 + $0xb50] sm:$0xff]
    %v398 = vld [vmem:[#allocation2 + $0xb58] sm:$0xff]
    %v399 = vld [vmem:[#allocation2 + $0xb60] sm:$0xff]
    %v400 = vld [vmem:[#allocation2 + $0xb68] sm:$0xff]
    %v401 = vld [vmem:[#allocation2 + $0xb70] sm:$0xff]
    %v402 = vld [vmem:[#allocation2 + $0xb78] sm:$0xff]
    %v403 = vld [vmem:[#allocation2 + $0xb80] sm:$0xff]
    %v404 = vld [vmem:[#allocation2 + $0xb88] sm:$0xff]
    %v405 = vld [vmem:[#allocation2 + $0xb90] sm:$0xff]
    %v406 = vld [vmem:[#allocation2 + $0xb98] sm:$0xff]
    %v407 = vld [vmem:[#allocation2 + $0xba0] sm:$0xff]
    %v408 = vld [vmem:[#allocation2 + $0xba8] sm:$0xff]
    %v409 = vld [vmem:[#allocation2 + $0xbb0] sm:$0xff]
    %v410 = vld [vmem:[#allocation2 + $0xbb8] sm:$0xff]
    %v411 = vld [vmem:[#allocation2 + $0xbc0] sm:$0xff]
    %v412 = vld [vmem:[#allocation2 + $0xbc8] sm:$0xff]
    %v413 = vld [vmem:[#allocation2 + $0xbd0] sm:$0xff]
    %v414 = vld [vmem:[#allocation2 + $0xbd8] sm:$0xff]
    %v415 = vld [vmem:[#allocation2 + $0xbe0] sm:$0xff]
    %v416 = vld [vmem:[#allocation2 + $0xbe8] sm:$0xff]
    %v417 = vld [vmem:[#allocation2 + $0xbf0] sm:$0xff]
    %v418 = vld [vmem:[#allocation2 + $0xbf8] sm:$0xff]
    %v419 = vld [vmem:[#allocation2 + $0xc00] sm:$0xff]
    %v420 = vld [vmem:[#allocation2 + $0xc08] sm:$0xff]
    %v421 = vld [vmem:[#allocation2 + $0xc10] sm:$0xff]
    %v422 = vld [vmem:[#allocation2 + $0xc18] sm:$0xff]
    %v423 = vld [vmem:[#allocation2 + $0xc20] sm:$0xff]
    %v424 = vld [vmem:[#allocation2 + $0xc28] sm:$0xff]
    %v425 = vld [vmem:[#allocation2 + $0xc30] sm:$0xff]
    %v426 = vld [vmem:[#allocation2 + $0xc38] sm:$0xff]
    %v427 = vld [vmem:[#allocation2 + $0xc40] sm:$0xff]
    %v428 = vld [vmem:[#allocation2 + $0xc48] sm:$0xff]
    %v429 = vld [vmem:[#allocation2 + $0xc50] sm:$0xff]
    %v430 = vld [vmem:[#allocation2 + $0xc58] sm:$0xff]
    %v431 = vld [vmem:[#allocation2 + $0xc60] sm:$0xff]
    %v432 = vld [vmem:[#allocation2 + $0xc68] sm:$0xff]
    %v433 = vld [vmem:[#allocation2 + $0xc70] sm:$0xff]
    %v434 = vld [vmem:[#allocation2 + $0xc78] sm:$0xff]
    %v435 = vld [vmem:[#allocation2 + $0xc80] sm:$0xff]
    %v436 = vld [vmem:[#allocation2 + $0xc88] sm:$0xff]
    %v437 = vld [vmem:[#allocation2 + $0xc90] sm:$0xff]
    %v438 = vld [vmem:[#allocation2 + $0xc98] sm:$0xff]
    %v439 = vld [vmem:[#allocation2 + $0xca0] sm:$0xff]
    %v440 = vld [vmem:[#allocation2 + $0xca8] sm:$0xff]
    %v441 = vld [vmem:[#allocation2 + $0xcb0] sm:$0xff]
    %v442 = vld [vmem:[#allocation2 + $0xcb8] sm:$0xff]
    %v443 = vld [vmem:[#allocation2 + $0xcc0] sm:$0xff]
    %v444 = vld [vmem:[#allocation2 + $0xcc8] sm:$0xff]
    %v445 = vld [vmem:[#allocation2 + $0xcd0] sm:$0xff]
    %v446 = vld [vmem:[#allocation2 + $0xcd8] sm:$0xff]
    %v447 = vld [vmem:[#allocation2 + $0xce0] sm:$0xff]
    %v448 = vld [vmem:[#allocation2 + $0xce8] sm:$0xff]
    %v449 = vld [vmem:[#allocation2 + $0xcf0] sm:$0xff]
    %v450 = vld [vmem:[#allocation2 + $0xcf8] sm:$0xff]
    %v451 = vld [vmem:[#allocation2 + $0xd00] sm:$0xff]
    %v452 = vld [vmem:[#allocation2 + $0xd08] sm:$0xff]
    %v453 = vld [vmem:[#allocation2 + $0xd10] sm:$0xff]
    %v454 = vld [vmem:[#allocation2 + $0xd18] sm:$0xff]
    %v455 = vld [vmem:[#allocation2 + $0xd20] sm:$0xff]
    %v456 = vld [vmem:[#allocation2 + $0xd28] sm:$0xff]
    %v457 = vld [vmem:[#allocation2 + $0xd30] sm:$0xff]
    %v458 = vld [vmem:[#allocation2 + $0xd38] sm:$0xff]
    %v459 = vld [vmem:[#allocation2 + $0xd40] sm:$0xff]
    %v460 = vld [vmem:[#allocation2 + $0xd48] sm:$0xff]
    %v461 = vld [vmem:[#allocation2 + $0xd50] sm:$0xff]
    %v462 = vld [vmem:[#allocation2 + $0xd58] sm:$0xff]
    %v463 = vld [vmem:[#allocation2 + $0xd60] sm:$0xff]
    %v464 = vld [vmem:[#allocation2 + $0xd68] sm:$0xff]
    %v465 = vld [vmem:[#allocation2 + $0xd70] sm:$0xff]
    %v466 = vld [vmem:[#allocation2 + $0xd78] sm:$0xff]
    %v467 = vld [vmem:[#allocation2 + $0xd80] sm:$0xff]
    %v468 = vld [vmem:[#allocation2 + $0xd88] sm:$0xff]
    %v469 = vld [vmem:[#allocation2 + $0xd90] sm:$0xff]
    %v470 = vld [vmem:[#allocation2 + $0xd98] sm:$0xff]
    %v471 = vld [vmem:[#allocation2 + $0xda0] sm:$0xff]
    %v472 = vld [vmem:[#allocation2 + $0xda8] sm:$0xff]
    %v473 = vld [vmem:[#allocation2 + $0xdb0] sm:$0xff]
    %v474 = vld [vmem:[#allocation2 + $0xdb8] sm:$0xff]
    %v475 = vld [vmem:[#allocation2 + $0xdc0] sm:$0xff]
    %v476 = vld [vmem:[#allocation2 + $0xdc8] sm:$0xff]
    %v477 = vld [vmem:[#allocation2 + $0xdd0] sm:$0xff]
    %v478 = vld [vmem:[#allocation2 + $0xdd8] sm:$0xff]
    %v479 = vld [vmem:[#allocation2 + $0xde0] sm:$0xff]
    %v480 = vld [vmem:[#allocation2 + $0xde8] sm:$0xff]
    %v481 = vld [vmem:[#allocation2 + $0xdf0] sm:$0xff]
    %v482 = vld [vmem:[#allocation2 + $0xdf8] sm:$0xff]
    %v483 = vld [vmem:[#allocation2 + $0xe00] sm:$0xff]
    %v484 = vld [vmem:[#allocation2 + $0xe08] sm:$0xff]
    %v485 = vld [vmem:[#allocation2 + $0xe10] sm:$0xff]
    %v486 = vld [vmem:[#allocation2 + $0xe18] sm:$0xff]
    %v487 = vld [vmem:[#allocation2 + $0xe20] sm:$0xff]
    %v488 = vld [vmem:[#allocation2 + $0xe28] sm:$0xff]
    %v489 = vld [vmem:[#allocation2 + $0xe30] sm:$0xff]
    %v490 = vld [vmem:[#allocation2 + $0xe38] sm:$0xff]
    %v491 = vld [vmem:[#allocation2 + $0xe40] sm:$0xff]
    %v492 = vld [vmem:[#allocation2 + $0xe48] sm:$0xff]
    %v493 = vld [vmem:[#allocation2 + $0xe50] sm:$0xff]
    %v494 = vld [vmem:[#allocation2 + $0xe58] sm:$0xff]
    %v495 = vld [vmem:[#allocation2 + $0xe60] sm:$0xff]
    %v496 = vld [vmem:[#allocation2 + $0xe68] sm:$0xff]
    %v497 = vld [vmem:[#allocation2 + $0xe70] sm:$0xff]
    %v498 = vld [vmem:[#allocation2 + $0xe78] sm:$0xff]
    %v499 = vld [vmem:[#allocation2 + $0xe80] sm:$0xff]
    %v500 = vld [vmem:[#allocation2 + $0xe88] sm:$0xff]
    %v501 = vld [vmem:[#allocation2 + $0xe90] sm:$0xff]
    %v502 = vld [vmem:[#allocation2 + $0xe98] sm:$0xff]
    %v503 = vld [vmem:[#allocation2 + $0xea0] sm:$0xff]
    %v504 = vld [vmem:[#allocation2 + $0xea8] sm:$0xff]
    %v505 = vld [vmem:[#allocation2 + $0xeb0] sm:$0xff]
    %v506 = vld [vmem:[#allocation2 + $0xeb8] sm:$0xff]
    %v507 = vld [vmem:[#allocation2 + $0xec0] sm:$0xff]
    %v508 = vld [vmem:[#allocation2 + $0xec8] sm:$0xff]
    %v509 = vld [vmem:[#allocation2 + $0xed0] sm:$0xff]
    %v510 = vld [vmem:[#allocation2 + $0xed8] sm:$0xff]
    %v511 = vld [vmem:[#allocation2 + $0xee0] sm:$0xff]
    %v512 = vld [vmem:[#allocation2 + $0xee8] sm:$0xff]
    %v513 = vld [vmem:[#allocation2 + $0xef0] sm:$0xff]
    %v514 = vld [vmem:[#allocation2 + $0xef8] sm:$0xff]
    %v515 = vld [vmem:[#allocation2 + $0xf00] sm:$0xff]
    %v516 = vld [vmem:[#allocation2 + $0xf08] sm:$0xff]
    %v517 = vld [vmem:[#allocation2 + $0xf10] sm:$0xff]
    %v518 = vld [vmem:[#allocation2 + $0xf18] sm:$0xff]
    %v519 = vld [vmem:[#allocation2 + $0xf20] sm:$0xff]
    %v520 = vld [vmem:[#allocation2 + $0xf28] sm:$0xff]
    %v521 = vld [vmem:[#allocation2 + $0xf30] sm:$0xff]
    %v522 = vld [vmem:[#allocation2 + $0xf38] sm:$0xff]
    %v523 = vld [vmem:[#allocation2 + $0xf40] sm:$0xff]
    %v524 = vld [vmem:[#allocation2 + $0xf48] sm:$0xff]
    %v525 = vld [vmem:[#allocation2 + $0xf50] sm:$0xff]
    %v526 = vld [vmem:[#allocation2 + $0xf58] sm:$0xff]
    %v527 = vld [vmem:[#allocation2 + $0xf60] sm:$0xff]
    %v528 = vld [vmem:[#allocation2 + $0xf68] sm:$0xff]
    %v529 = vld [vmem:[#allocation2 + $0xf70] sm:$0xff]
    %v530 = vld [vmem:[#allocation2 + $0xf78] sm:$0xff]
    %v531 = vld [vmem:[#allocation2 + $0xf80] sm:$0xff]
    %v532 = vld [vmem:[#allocation2 + $0xf88] sm:$0xff]
    %v533 = vld [vmem:[#allocation2 + $0xf90] sm:$0xff]
    %v534 = vld [vmem:[#allocation2 + $0xf98] sm:$0xff]
    %v535 = vld [vmem:[#allocation2 + $0xfa0] sm:$0xff]
    %v536 = vld [vmem:[#allocation2 + $0xfa8] sm:$0xff]
    %v537 = vld [vmem:[#allocation2 + $0xfb0] sm:$0xff]
    %v538 = vld [vmem:[#allocation2 + $0xfb8] sm:$0xff]
    %v539 = vld [vmem:[#allocation2 + $0xfc0] sm:$0xff]
    %v540 = vld [vmem:[#allocation2 + $0xfc8] sm:$0xff]
    %v541 = vld [vmem:[#allocation2 + $0xfd0] sm:$0xff]
    %v542 = vld [vmem:[#allocation2 + $0xfd8] sm:$0xff]
    %v543 = vld [vmem:[#allocation2 + $0xfe0] sm:$0xff]
    %v544 = vld [vmem:[#allocation2 + $0xfe8] sm:$0xff]
    %v545 = vld [vmem:[#allocation2 + $0xff0] sm:$0xff]
    %v546 = vld [vmem:[#allocation2 + $0xff8] sm:$0xff]
    %547 = vmatpush.msra.mxu0 %v95
    %548 = vmatpush.msra.mxu0 %v91
    %549 = vmatpush.msra.mxu0 %v87
    %550 = vmatpush.msra.mxu0 %v83
    %551 = vmatpush.msra.mxu0 %v79
    %552 = vmatpush.msra.mxu0 %v75
    %553 = vmatpush.msra.mxu0 %v71
    %554 = vmatpush.msra.mxu0 %v67
    %555 = vmatpush.msra.mxu0 %v63
    %556 = vmatpush.msra.mxu0 %v59
    %557 = vmatpush.msra.mxu0 %v55
    %558 = vmatpush.msra.mxu0 %v51
    %559 = vmatpush.msra.mxu0 %v47
    %560 = vmatpush.msra.mxu0 %v43
    %561 = vmatpush.msra.mxu0 %v39
    %562 = vmatpush.msra.mxu0 %v35
    %563 = vmatmul.f32.gmra.mxu0 %v27
    %v564 = vpop.f32.mrf.mxu0
    %v565 = vadd.f32 0.0, %v564
    %566 = vdwg.mxu0
    %567 = vmatpush.msra.mxu0 %v159
    %568 = vmatpush.msra.mxu0 %v155
    %569 = vmatpush.msra.mxu0 %v151
    %570 = vmatpush.msra.mxu0 %v147
    %571 = vmatpush.msra.mxu0 %v143
    %572 = vmatpush.msra.mxu0 %v139
    %573 = vmatpush.msra.mxu0 %v135
    %574 = vmatpush.msra.mxu0 %v131
    %575 = vmatpush.msra.mxu0 %v127
    %576 = vmatpush.msra.mxu0 %v123
    %577 = vmatpush.msra.mxu0 %v119
    %578 = vmatpush.msra.mxu0 %v115
    %579 = vmatpush.msra.mxu0 %v111
    %580 = vmatpush.msra.mxu0 %v107
    %581 = vmatpush.msra.mxu0 %v103
    %582 = vmatpush.msra.mxu0 %v99
    %583 = vmatmul.f32.gmra.mxu0 %v28
    %v584 = vpop.f32.mrf.mxu0
    %v585 = vadd.f32 %v565, %v584
    %586 = vdwg.mxu0
    %587 = vmatpush.msra.mxu0 %v223
    %588 = vmatpush.msra.mxu0 %v219
    %589 = vmatpush.msra.mxu0 %v215
    %590 = vmatpush.msra.mxu0 %v211
    %591 = vmatpush.msra.mxu0 %v207
    %592 = vmatpush.msra.mxu0 %v203
    %593 = vmatpush.msra.mxu0 %v199
    %594 = vmatpush.msra.mxu0 %v195
    %595 = vmatpush.msra.mxu0 %v191
    %596 = vmatpush.msra.mxu0 %v187
    %597 = vmatpush.msra.mxu0 %v183
    %598 = vmatpush.msra.mxu0 %v179
    %599 = vmatpush.msra.mxu0 %v175
    %600 = vmatpush.msra.mxu0 %v171
    %601 = vmatpush.msra.mxu0 %v167
    %602 = vmatpush.msra.mxu0 %v163
    %603 = vmatmul.f32.gmra.mxu0 %v29
    %v604 = vpop.f32.mrf.mxu0
    %v605 = vadd.f32 %v585, %v604
    %606 = vdwg.mxu0
    %607 = vmatpush.msra.mxu0 %v287
    %608 = vmatpush.msra.mxu0 %v283
    %609 = vmatpush.msra.mxu0 %v279
    %610 = vmatpush.msra.mxu0 %v275
    %611 = vmatpush.msra.mxu0 %v271
    %612 = vmatpush.msra.mxu0 %v267
    %613 = vmatpush.msra.mxu0 %v263
    %614 = vmatpush.msra.mxu0 %v259
    %615 = vmatpush.msra.mxu0 %v255
    %616 = vmatpush.msra.mxu0 %v251
    %617 = vmatpush.msra.mxu0 %v247
    %618 = vmatpush.msra.mxu0 %v243
    %619 = vmatpush.msra.mxu0 %v239
    %620 = vmatpush.msra.mxu0 %v235
    %621 = vmatpush.msra.mxu0 %v231
    %622 = vmatpush.msra.mxu0 %v227
    %623 = vmatmul.f32.gmra.mxu0 %v30
    %v624 = vpop.f32.mrf.mxu0
    %v625 = vadd.f32 %v605, %v624
    %626 = vdwg.mxu0
    %627 = vmatpush.msra.mxu0 %v351
    %628 = vmatpush.msra.mxu0 %v347
    %629 = vmatpush.msra.mxu0 %v343
    %630 = vmatpush.msra.mxu0 %v339
    %631 = vmatpush.msra.mxu0 %v335
    %632 = vmatpush.msra.mxu0 %v331
    %633 = vmatpush.msra.mxu0 %v327
    %634 = vmatpush.msra.mxu0 %v323
    %635 = vmatpush.msra.mxu0 %v319
    %636 = vmatpush.msra.mxu0 %v315
    %637 = vmatpush.msra.mxu0 %v311
    %638 = vmatpush.msra.mxu0 %v307
    %639 = vmatpush.msra.mxu0 %v303
    %640 = vmatpush.msra.mxu0 %v299
    %641 = vmatpush.msra.mxu0 %v295
    %642 = vmatpush.msra.mxu0 %v291
    %643 = vmatmul.f32.gmra.mxu0 %v31
    %v644 = vpop.f32.mrf.mxu0
    %v645 = vadd.f32 %v625, %v644
    %646 = vdwg.mxu0
    %647 = vmatpush.msra.mxu0 %v415
    %648 = vmatpush.msra.mxu0 %v411
    %649 = vmatpush.msra.mxu0 %v407
    %650 = vmatpush.msra.mxu0 %v403
    %651 = vmatpush.msra.mxu0 %v399
    %652 = vmatpush.msra.mxu0 %v395
    %653 = vmatpush.msra.mxu0 %v391
    %654 = vmatpush.msra.mxu0 %v387
    %655 = vmatpush.msra.mxu0 %v383
    %656 = vmatpush.msra.mxu0 %v379
    %657 = vmatpush.msra.mxu0 %v375
    %658 = vmatpush.msra.mxu0 %v371
    %659 = vmatpush.msra.mxu0 %v367
    %660 = vmatpush.msra.mxu0 %v363
    %661 = vmatpush.msra.mxu0 %v359
    %662 = vmatpush.msra.mxu0 %v355
    %663 = vmatmul.f32.gmra.mxu0 %v32
    %v664 = vpop.f32.mrf.mxu0
    %v665 = vadd.f32 %v645, %v664
    %666 = vdwg.mxu0
    %667 = vmatpush.msra.mxu0 %v479
    %668 = vmatpush.msra.mxu0 %v475
    %669 = vmatpush.msra.mxu0 %v471
    %670 = vmatpush.msra.mxu0 %v467
    %671 = vmatpush.msra.mxu0 %v463
    %672 = vmatpush.msra.mxu0 %v459
    %673 = vmatpush.msra.mxu0 %v455
    %674 = vmatpush.msra.mxu0 %v451
    %675 = vmatpush.msra.mxu0 %v447
    %676 = vmatpush.msra.mxu0 %v443
    %677 = vmatpush.msra.mxu0 %v439
    %678 = vmatpush.msra.mxu0 %v435
    %679 = vmatpush.msra.mxu0 %v431
    %680 = vmatpush.msra.mxu0 %v427
    %681 = vmatpush.msra.mxu0 %v423
    %682 = vmatpush.msra.mxu0 %v419
    %683 = vmatmul.f32.gmra.mxu0 %v33
    %v684 = vpop.f32.mrf.mxu0
    %v685 = vadd.f32 %v665, %v684
    %686 = vdwg.mxu0
    %687 = vmatpush.msra.mxu0 %v543
    %688 = vmatpush.msra.mxu0 %v539
    %689 = vmatpush.msra.mxu0 %v535
    %690 = vmatpush.msra.mxu0 %v531
    %691 = vmatpush.msra.mxu0 %v527
    %692 = vmatpush.msra.mxu0 %v523
    %693 = vmatpush.msra.mxu0 %v519
    %694 = vmatpush.msra.mxu0 %v515
    %695 = vmatpush.msra.mxu0 %v511
    %696 = vmatpush.msra.mxu0 %v507
    %697 = vmatpush.msra.mxu0 %v503
    %698 = vmatpush.msra.mxu0 %v499
    %699 = vmatpush.msra.mxu0 %v495
    %700 = vmatpush.msra.mxu0 %v491
    %701 = vmatpush.msra.mxu0 %v487
    %702 = vmatpush.msra.mxu0 %v483
    %703 = vmatmul.f32.gmra.mxu0 %v34
    %v704 = vpop.f32.mrf.mxu0
    %v705 = vadd.f32 %v685, %v704
    %706 = vdwg.mxu0
    %707 = vmatpush.msra.mxu0 %v96
    %708 = vmatpush.msra.mxu0 %v92
    %709 = vmatpush.msra.mxu0 %v88
    %710 = vmatpush.msra.mxu0 %v84
    %711 = vmatpush.msra.mxu0 %v80
    %712 = vmatpush.msra.mxu0 %v76
    %713 = vmatpush.msra.mxu0 %v72
    %714 = vmatpush.msra.mxu0 %v68
    %715 = vmatpush.msra.mxu0 %v64
    %716 = vmatpush.msra.mxu0 %v60
    %717 = vmatpush.msra.mxu0 %v56
    %718 = vmatpush.msra.mxu0 %v52
    %719 = vmatpush.msra.mxu0 %v48
    %720 = vmatpush.msra.mxu0 %v44
    %721 = vmatpush.msra.mxu0 %v40
    %722 = vmatpush.msra.mxu0 %v36
    %723 = vmatmul.f32.gmra.mxu0 %v27
    %v724 = vpop.f32.mrf.mxu0
    %v725 = vadd.f32 0.0, %v724
    %726 = vdwg.mxu0
    %727 = vmatpush.msra.mxu0 %v160
    %728 = vmatpush.msra.mxu0 %v156
    %729 = vmatpush.msra.mxu0 %v152
    %730 = vmatpush.msra.mxu0 %v148
    %731 = vmatpush.msra.mxu0 %v144
    %732 = vmatpush.msra.mxu0 %v140
    %733 = vmatpush.msra.mxu0 %v136
    %734 = vmatpush.msra.mxu0 %v132
    %735 = vmatpush.msra.mxu0 %v128
    %736 = vmatpush.msra.mxu0 %v124
    %737 = vmatpush.msra.mxu0 %v120
    %738 = vmatpush.msra.mxu0 %v116
    %739 = vmatpush.msra.mxu0 %v112
    %740 = vmatpush.msra.mxu0 %v108
    %741 = vmatpush.msra.mxu0 %v104
    %742 = vmatpush.msra.mxu0 %v100
    %743 = vmatmul.f32.gmra.mxu0 %v28
    %v744 = vpop.f32.mrf.mxu0
    %v745 = vadd.f32 %v725, %v744
    %746 = vdwg.mxu0
    %747 = vmatpush.msra.mxu0 %v224
    %748 = vmatpush.msra.mxu0 %v220
    %749 = vmatpush.msra.mxu0 %v216
    %750 = vmatpush.msra.mxu0 %v212
    %751 = vmatpush.msra.mxu0 %v208
    %752 = vmatpush.msra.mxu0 %v204
    %753 = vmatpush.msra.mxu0 %v200
    %754 = vmatpush.msra.mxu0 %v196
    %755 = vmatpush.msra.mxu0 %v192
    %756 = vmatpush.msra.mxu0 %v188
    %757 = vmatpush.msra.mxu0 %v184
    %758 = vmatpush.msra.mxu0 %v180
    %759 = vmatpush.msra.mxu0 %v176
    %760 = vmatpush.msra.mxu0 %v172
    %761 = vmatpush.msra.mxu0 %v168
    %762 = vmatpush.msra.mxu0 %v164
    %763 = vmatmul.f32.gmra.mxu0 %v29
    %v764 = vpop.f32.mrf.mxu0
    %v765 = vadd.f32 %v745, %v764
    %766 = vdwg.mxu0
    %767 = vmatpush.msra.mxu0 %v288
    %768 = vmatpush.msra.mxu0 %v284
    %769 = vmatpush.msra.mxu0 %v280
    %770 = vmatpush.msra.mxu0 %v276
    %771 = vmatpush.msra.mxu0 %v272
    %772 = vmatpush.msra.mxu0 %v268
    %773 = vmatpush.msra.mxu0 %v264
    %774 = vmatpush.msra.mxu0 %v260
    %775 = vmatpush.msra.mxu0 %v256
    %776 = vmatpush.msra.mxu0 %v252
    %777 = vmatpush.msra.mxu0 %v248
    %778 = vmatpush.msra.mxu0 %v244
    %779 = vmatpush.msra.mxu0 %v240
    %780 = vmatpush.msra.mxu0 %v236
    %781 = vmatpush.msra.mxu0 %v232
    %782 = vmatpush.msra.mxu0 %v228
    %783 = vmatmul.f32.gmra.mxu0 %v30
    %v784 = vpop.f32.mrf.mxu0
    %v785 = vadd.f32 %v765, %v784
    %786 = vdwg.mxu0
    %787 = vmatpush.msra.mxu0 %v352
    %788 = vmatpush.msra.mxu0 %v348
    %789 = vmatpush.msra.mxu0 %v344
    %790 = vmatpush.msra.mxu0 %v340
    %791 = vmatpush.msra.mxu0 %v336
    %792 = vmatpush.msra.mxu0 %v332
    %793 = vmatpush.msra.mxu0 %v328
    %794 = vmatpush.msra.mxu0 %v324
    %795 = vmatpush.msra.mxu0 %v320
    %796 = vmatpush.msra.mxu0 %v316
    %797 = vmatpush.msra.mxu0 %v312
    %798 = vmatpush.msra.mxu0 %v308
    %799 = vmatpush.msra.mxu0 %v304
    %800 = vmatpush.msra.mxu0 %v300
    %801 = vmatpush.msra.mxu0 %v296
    %802 = vmatpush.msra.mxu0 %v292
    %803 = vmatmul.f32.gmra.mxu0 %v31
    %v804 = vpop.f32.mrf.mxu0
    %v805 = vadd.f32 %v785, %v804
    %806 = vdwg.mxu0
    %807 = vmatpush.msra.mxu0 %v416
    %808 = vmatpush.msra.mxu0 %v412
    %809 = vmatpush.msra.mxu0 %v408
    %810 = vmatpush.msra.mxu0 %v404
    %811 = vmatpush.msra.mxu0 %v400
    %812 = vmatpush.msra.mxu0 %v396
    %813 = vmatpush.msra.mxu0 %v392
    %814 = vmatpush.msra.mxu0 %v388
    %815 = vmatpush.msra.mxu0 %v384
    %816 = vmatpush.msra.mxu0 %v380
    %817 = vmatpush.msra.mxu0 %v376
    %818 = vmatpush.msra.mxu0 %v372
    %819 = vmatpush.msra.mxu0 %v368
    %820 = vmatpush.msra.mxu0 %v364
    %821 = vmatpush.msra.mxu0 %v360
    %822 = vmatpush.msra.mxu0 %v356
    %823 = vmatmul.f32.gmra.mxu0 %v32
    %v824 = vpop.f32.mrf.mxu0
    %v825 = vadd.f32 %v805, %v824
    %826 = vdwg.mxu0
    %827 = vmatpush.msra.mxu0 %v480
    %828 = vmatpush.msra.mxu0 %v476
    %829 = vmatpush.msra.mxu0 %v472
    %830 = vmatpush.msra.mxu0 %v468
    %831 = vmatpush.msra.mxu0 %v464
    %832 = vmatpush.msra.mxu0 %v460
    %833 = vmatpush.msra.mxu0 %v456
    %834 = vmatpush.msra.mxu0 %v452
    %835 = vmatpush.msra.mxu0 %v448
    %836 = vmatpush.msra.mxu0 %v444
    %837 = vmatpush.msra.mxu0 %v440
    %838 = vmatpush.msra.mxu0 %v436
    %839 = vmatpush.msra.mxu0 %v432
    %840 = vmatpush.msra.mxu0 %v428
    %841 = vmatpush.msra.mxu0 %v424
    %842 = vmatpush.msra.mxu0 %v420
    %843 = vmatmul.f32.gmra.mxu0 %v33
    %v844 = vpop.f32.mrf.mxu0
    %v845 = vadd.f32 %v825, %v844
    %846 = vdwg.mxu0
    %847 = vmatpush.msra.mxu0 %v544
    %848 = vmatpush.msra.mxu0 %v540
    %849 = vmatpush.msra.mxu0 %v536
    %850 = vmatpush.msra.mxu0 %v532
    %851 = vmatpush.msra.mxu0 %v528
    %852 = vmatpush.msra.mxu0 %v524
    %853 = vmatpush.msra.mxu0 %v520
    %854 = vmatpush.msra.mxu0 %v516
    %855 = vmatpush.msra.mxu0 %v512
    %856 = vmatpush.msra.mxu0 %v508
    %857 = vmatpush.msra.mxu0 %v504
    %858 = vmatpush.msra.mxu0 %v500
    %859 = vmatpush.msra.mxu0 %v496
    %860 = vmatpush.msra.mxu0 %v492
    %861 = vmatpush.msra.mxu0 %v488
    %862 = vmatpush.msra.mxu0 %v484
    %863 = vmatmul.f32.gmra.mxu0 %v34
    %v864 = vpop.f32.mrf.mxu0
    %v865 = vadd.f32 %v845, %v864
    %866 = vdwg.mxu0
    %867 = vmatpush.msra.mxu0 %v97
    %868 = vmatpush.msra.mxu0 %v93
    %869 = vmatpush.msra.mxu0 %v89
    %870 = vmatpush.msra.mxu0 %v85
    %871 = vmatpush.msra.mxu0 %v81
    %872 = vmatpush.msra.mxu0 %v77
    %873 = vmatpush.msra.mxu0 %v73
    %874 = vmatpush.msra.mxu0 %v69
    %875 = vmatpush.msra.mxu0 %v65
    %876 = vmatpush.msra.mxu0 %v61
    %877 = vmatpush.msra.mxu0 %v57
    %878 = vmatpush.msra.mxu0 %v53
    %879 = vmatpush.msra.mxu0 %v49
    %880 = vmatpush.msra.mxu0 %v45
    %881 = vmatpush.msra.mxu0 %v41
    %882 = vmatpush.msra.mxu0 %v37
    %883 = vmatmul.f32.gmra.mxu0 %v27
    %v884 = vpop.f32.mrf.mxu0
    %v885 = vadd.f32 0.0, %v884
    %886 = vdwg.mxu0
    %887 = vmatpush.msra.mxu0 %v161
    %888 = vmatpush.msra.mxu0 %v157
    %889 = vmatpush.msra.mxu0 %v153
    %890 = vmatpush.msra.mxu0 %v149
    %891 = vmatpush.msra.mxu0 %v145
    %892 = vmatpush.msra.mxu0 %v141
    %893 = vmatpush.msra.mxu0 %v137
    %894 = vmatpush.msra.mxu0 %v133
    %895 = vmatpush.msra.mxu0 %v129
    %896 = vmatpush.msra.mxu0 %v125
    %897 = vmatpush.msra.mxu0 %v121
    %898 = vmatpush.msra.mxu0 %v117
    %899 = vmatpush.msra.mxu0 %v113
    %900 = vmatpush.msra.mxu0 %v109
    %901 = vmatpush.msra.mxu0 %v105
    %902 = vmatpush.msra.mxu0 %v101
    %903 = vmatmul.f32.gmra.mxu0 %v28
    %v904 = vpop.f32.mrf.mxu0
    %v905 = vadd.f32 %v885, %v904
    %906 = vdwg.mxu0
    %907 = vmatpush.msra.mxu0 %v225
    %908 = vmatpush.msra.mxu0 %v221
    %909 = vmatpush.msra.mxu0 %v217
    %910 = vmatpush.msra.mxu0 %v213
    %911 = vmatpush.msra.mxu0 %v209
    %912 = vmatpush.msra.mxu0 %v205
    %913 = vmatpush.msra.mxu0 %v201
    %914 = vmatpush.msra.mxu0 %v197
    %915 = vmatpush.msra.mxu0 %v193
    %916 = vmatpush.msra.mxu0 %v189
    %917 = vmatpush.msra.mxu0 %v185
    %918 = vmatpush.msra.mxu0 %v181
    %919 = vmatpush.msra.mxu0 %v177
    %920 = vmatpush.msra.mxu0 %v173
    %921 = vmatpush.msra.mxu0 %v169
    %922 = vmatpush.msra.mxu0 %v165
    %923 = vmatmul.f32.gmra.mxu0 %v29
    %v924 = vpop.f32.mrf.mxu0
    %v925 = vadd.f32 %v905, %v924
    %926 = vdwg.mxu0
    %927 = vmatpush.msra.mxu0 %v289
    %928 = vmatpush.msra.mxu0 %v285
    %929 = vmatpush.msra.mxu0 %v281
    %930 = vmatpush.msra.mxu0 %v277
    %931 = vmatpush.msra.mxu0 %v273
    %932 = vmatpush.msra.mxu0 %v269
    %933 = vmatpush.msra.mxu0 %v265
    %934 = vmatpush.msra.mxu0 %v261
    %935 = vmatpush.msra.mxu0 %v257
    %936 = vmatpush.msra.mxu0 %v253
    %937 = vmatpush.msra.mxu0 %v249
    %938 = vmatpush.msra.mxu0 %v245
    %939 = vmatpush.msra.mxu0 %v241
    %940 = vmatpush.msra.mxu0 %v237
    %941 = vmatpush.msra.mxu0 %v233
    %942 = vmatpush.msra.mxu0 %v229
    %943 = vmatmul.f32.gmra.mxu0 %v30
    %v944 = vpop.f32.mrf.mxu0
    %v945 = vadd.f32 %v925, %v944
    %946 = vdwg.mxu0
    %947 = vmatpush.msra.mxu0 %v353
    %948 = vmatpush.msra.mxu0 %v349
    %949 = vmatpush.msra.mxu0 %v345
    %950 = vmatpush.msra.mxu0 %v341
    %951 = vmatpush.msra.mxu0 %v337
    %952 = vmatpush.msra.mxu0 %v333
    %953 = vmatpush.msra.mxu0 %v329
    %954 = vmatpush.msra.mxu0 %v325
    %955 = vmatpush.msra.mxu0 %v321
    %956 = vmatpush.msra.mxu0 %v317
    %957 = vmatpush.msra.mxu0 %v313
    %958 = vmatpush.msra.mxu0 %v309
    %959 = vmatpush.msra.mxu0 %v305
    %960 = vmatpush.msra.mxu0 %v301
    %961 = vmatpush.msra.mxu0 %v297
    %962 = vmatpush.msra.mxu0 %v293
    %963 = vmatmul.f32.gmra.mxu0 %v31
    %v964 = vpop.f32.mrf.mxu0
    %v965 = vadd.f32 %v945, %v964
    %966 = vdwg.mxu0
    %967 = vmatpush.msra.mxu0 %v417
    %968 = vmatpush.msra.mxu0 %v413
    %969 = vmatpush.msra.mxu0 %v409
    %970 = vmatpush.msra.mxu0 %v405
    %971 = vmatpush.msra.mxu0 %v401
    %972 = vmatpush.msra.mxu0 %v397
    %973 = vmatpush.msra.mxu0 %v393
    %974 = vmatpush.msra.mxu0 %v389
    %975 = vmatpush.msra.mxu0 %v385
    %976 = vmatpush.msra.mxu0 %v381
    %977 = vmatpush.msra.mxu0 %v377
    %978 = vmatpush.msra.mxu0 %v373
    %979 = vmatpush.msra.mxu0 %v369
    %980 = vmatpush.msra.mxu0 %v365
    %981 = vmatpush.msra.mxu0 %v361
    %982 = vmatpush.msra.mxu0 %v357
    %983 = vmatmul.f32.gmra.mxu0 %v32
    %v984 = vpop.f32.mrf.mxu0
    %v985 = vadd.f32 %v965, %v984
    %986 = vdwg.mxu0
    %987 = vmatpush.msra.mxu0 %v481
    %988 = vmatpush.msra.mxu0 %v477
    %989 = vmatpush.msra.mxu0 %v473
    %990 = vmatpush.msra.mxu0 %v469
    %991 = vmatpush.msra.mxu0 %v465
    %992 = vmatpush.msra.mxu0 %v461
    %993 = vmatpush.msra.mxu0 %v457
    %994 = vmatpush.msra.mxu0 %v453
    %995 = vmatpush.msra.mxu0 %v449
    %996 = vmatpush.msra.mxu0 %v445
    %997 = vmatpush.msra.mxu0 %v441
    %998 = vmatpush.msra.mxu0 %v437
    %999 = vmatpush.msra.mxu0 %v433
    %1000 = vmatpush.msra.mxu0 %v429
    %1001 = vmatpush.msra.mxu0 %v425
    %1002 = vmatpush.msra.mxu0 %v421
    %1003 = vmatmul.f32.gmra.mxu0 %v33
    %v1004 = vpop.f32.mrf.mxu0
    %v1005 = vadd.f32 %v985, %v1004
    %1006 = vdwg.mxu0
    %1007 = vmatpush.msra.mxu0 %v545
    %1008 = vmatpush.msra.mxu0 %v541
    %1009 = vmatpush.msra.mxu0 %v537
    %1010 = vmatpush.msra.mxu0 %v533
    %1011 = vmatpush.msra.mxu0 %v529
    %1012 = vmatpush.msra.mxu0 %v525
    %1013 = vmatpush.msra.mxu0 %v521
    %1014 = vmatpush.msra.mxu0 %v517
    %1015 = vmatpush.msra.mxu0 %v513
    %1016 = vmatpush.msra.mxu0 %v509
    %1017 = vmatpush.msra.mxu0 %v505
    %1018 = vmatpush.msra.mxu0 %v501
    %1019 = vmatpush.msra.mxu0 %v497
    %1020 = vmatpush.msra.mxu0 %v493
    %1021 = vmatpush.msra.mxu0 %v489
    %1022 = vmatpush.msra.mxu0 %v485
    %1023 = vmatmul.f32.gmra.mxu0 %v34
    %v1024 = vpop.f32.mrf.mxu0
    %v1025 = vadd.f32 %v1005, %v1024
    %1026 = vdwg.mxu0
    %1027 = vmatpush.msra.mxu0 %v98
    %1028 = vmatpush.msra.mxu0 %v94
    %1029 = vmatpush.msra.mxu0 %v90
    %1030 = vmatpush.msra.mxu0 %v86
    %1031 = vmatpush.msra.mxu0 %v82
    %1032 = vmatpush.msra.mxu0 %v78
    %1033 = vmatpush.msra.mxu0 %v74
    %1034 = vmatpush.msra.mxu0 %v70
    %1035 = vmatpush.msra.mxu0 %v66
    %1036 = vmatpush.msra.mxu0 %v62
    %1037 = vmatpush.msra.mxu0 %v58
    %1038 = vmatpush.msra.mxu0 %v54
    %1039 = vmatpush.msra.mxu0 %v50
    %1040 = vmatpush.msra.mxu0 %v46
    %1041 = vmatpush.msra.mxu0 %v42
    %1042 = vmatpush.msra.mxu0 %v38
    %1043 = vmatmul.f32.gmra.mxu0 %v27
    %v1044 = vpop.f32.mrf.mxu0
    %v1045 = vadd.f32 0.0, %v1044
    %1046 = vdwg.mxu0
    %1047 = vmatpush.msra.mxu0 %v162
    %1048 = vmatpush.msra.mxu0 %v158
    %1049 = vmatpush.msra.mxu0 %v154
    %1050 = vmatpush.msra.mxu0 %v150
    %1051 = vmatpush.msra.mxu0 %v146
    %1052 = vmatpush.msra.mxu0 %v142
    %1053 = vmatpush.msra.mxu0 %v138
    %1054 = vmatpush.msra.mxu0 %v134
    %1055 = vmatpush.msra.mxu0 %v130
    %1056 = vmatpush.msra.mxu0 %v126
    %1057 = vmatpush.msra.mxu0 %v122
    %1058 = vmatpush.msra.mxu0 %v118
    %1059 = vmatpush.msra.mxu0 %v114
    %1060 = vmatpush.msra.mxu0 %v110
    %1061 = vmatpush.msra.mxu0 %v106
    %1062 = vmatpush.msra.mxu0 %v102
    %1063 = vmatmul.f32.gmra.mxu0 %v28
    %v1064 = vpop.f32.mrf.mxu0
    %v1065 = vadd.f32 %v1045, %v1064
    %1066 = vdwg.mxu0
    %1067 = vmatpush.msra.mxu0 %v226
    %1068 = vmatpush.msra.mxu0 %v222
    %1069 = vmatpush.msra.mxu0 %v218
    %1070 = vmatpush.msra.mxu0 %v214
    %1071 = vmatpush.msra.mxu0 %v210
    %1072 = vmatpush.msra.mxu0 %v206
    %1073 = vmatpush.msra.mxu0 %v202
    %1074 = vmatpush.msra.mxu0 %v198
    %1075 = vmatpush.msra.mxu0 %v194
    %1076 = vmatpush.msra.mxu0 %v190
    %1077 = vmatpush.msra.mxu0 %v186
    %1078 = vmatpush.msra.mxu0 %v182
    %1079 = vmatpush.msra.mxu0 %v178
    %1080 = vmatpush.msra.mxu0 %v174
    %1081 = vmatpush.msra.mxu0 %v170
    %1082 = vmatpush.msra.mxu0 %v166
    %1083 = vmatmul.f32.gmra.mxu0 %v29
    %v1084 = vpop.f32.mrf.mxu0
    %v1085 = vadd.f32 %v1065, %v1084
    %1086 = vdwg.mxu0
    %1087 = vmatpush.msra.mxu0 %v290
    %1088 = vmatpush.msra.mxu0 %v286
    %1089 = vmatpush.msra.mxu0 %v282
    %1090 = vmatpush.msra.mxu0 %v278
    %1091 = vmatpush.msra.mxu0 %v274
    %1092 = vmatpush.msra.mxu0 %v270
    %1093 = vmatpush.msra.mxu0 %v266
    %1094 = vmatpush.msra.mxu0 %v262
    %1095 = vmatpush.msra.mxu0 %v258
    %1096 = vmatpush.msra.mxu0 %v254
    %1097 = vmatpush.msra.mxu0 %v250
    %1098 = vmatpush.msra.mxu0 %v246
    %1099 = vmatpush.msra.mxu0 %v242
    %1100 = vmatpush.msra.mxu0 %v238
    %1101 = vmatpush.msra.mxu0 %v234
    %1102 = vmatpush.msra.mxu0 %v230
    %1103 = vmatmul.f32.gmra.mxu0 %v30
    %v1104 = vpop.f32.mrf.mxu0
    %v1105 = vadd.f32 %v1085, %v1104
    %1106 = vdwg.mxu0
    %1107 = vmatpush.msra.mxu0 %v354
    %1108 = vmatpush.msra.mxu0 %v350
    %1109 = vmatpush.msra.mxu0 %v346
    %1110 = vmatpush.msra.mxu0 %v342
    %1111 = vmatpush.msra.mxu0 %v338
    %1112 = vmatpush.msra.mxu0 %v334
    %1113 = vmatpush.msra.mxu0 %v330
    %1114 = vmatpush.msra.mxu0 %v326
    %1115 = vmatpush.msra.mxu0 %v322
    %1116 = vmatpush.msra.mxu0 %v318
    %1117 = vmatpush.msra.mxu0 %v314
    %1118 = vmatpush.msra.mxu0 %v310
    %1119 = vmatpush.msra.mxu0 %v306
    %1120 = vmatpush.msra.mxu0 %v302
    %1121 = vmatpush.msra.mxu0 %v298
    %1122 = vmatpush.msra.mxu0 %v294
    %1123 = vmatmul.f32.gmra.mxu0 %v31
    %v1124 = vpop.f32.mrf.mxu0
    %v1125 = vadd.f32 %v1105, %v1124
    %1126 = vdwg.mxu0
    %1127 = vmatpush.msra.mxu0 %v418
    %1128 = vmatpush.msra.mxu0 %v414
    %1129 = vmatpush.msra.mxu0 %v410
    %1130 = vmatpush.msra.mxu0 %v406
    %1131 = vmatpush.msra.mxu0 %v402
    %1132 = vmatpush.msra.mxu0 %v398
    %1133 = vmatpush.msra.mxu0 %v394
    %1134 = vmatpush.msra.mxu0 %v390
    %1135 = vmatpush.msra.mxu0 %v386
    %1136 = vmatpush.msra.mxu0 %v382
    %1137 = vmatpush.msra.mxu0 %v378
    %1138 = vmatpush.msra.mxu0 %v374
    %1139 = vmatpush.msra.mxu0 %v370
    %1140 = vmatpush.msra.mxu0 %v366
    %1141 = vmatpush.msra.mxu0 %v362
    %1142 = vmatpush.msra.mxu0 %v358
    %1143 = vmatmul.f32.gmra.mxu0 %v32
    %v1144 = vpop.f32.mrf.mxu0
    %v1145 = vadd.f32 %v1125, %v1144
    %1146 = vdwg.mxu0
    %1147 = vmatpush.msra.mxu0 %v482
    %1148 = vmatpush.msra.mxu0 %v478
    %1149 = vmatpush.msra.mxu0 %v474
    %1150 = vmatpush.msra.mxu0 %v470
    %1151 = vmatpush.msra.mxu0 %v466
    %1152 = vmatpush.msra.mxu0 %v462
    %1153 = vmatpush.msra.mxu0 %v458
    %1154 = vmatpush.msra.mxu0 %v454
    %1155 = vmatpush.msra.mxu0 %v450
    %1156 = vmatpush.msra.mxu0 %v446
    %1157 = vmatpush.msra.mxu0 %v442
    %1158 = vmatpush.msra.mxu0 %v438
    %1159 = vmatpush.msra.mxu0 %v434
    %1160 = vmatpush.msra.mxu0 %v430
    %1161 = vmatpush.msra.mxu0 %v426
    %1162 = vmatpush.msra.mxu0 %v422
    %1163 = vmatmul.f32.gmra.mxu0 %v33
    %v1164 = vpop.f32.mrf.mxu0
    %v1165 = vadd.f32 %v1145, %v1164
    %1166 = vdwg.mxu0
    %1167 = vmatpush.msra.mxu0 %v546
    %1168 = vmatpush.msra.mxu0 %v542
    %1169 = vmatpush.msra.mxu0 %v538
    %1170 = vmatpush.msra.mxu0 %v534
    %1171 = vmatpush.msra.mxu0 %v530
    %1172 = vmatpush.msra.mxu0 %v526
    %1173 = vmatpush.msra.mxu0 %v522
    %1174 = vmatpush.msra.mxu0 %v518
    %1175 = vmatpush.msra.mxu0 %v514
    %1176 = vmatpush.msra.mxu0 %v510
    %1177 = vmatpush.msra.mxu0 %v506
    %1178 = vmatpush.msra.mxu0 %v502
    %1179 = vmatpush.msra.mxu0 %v498
    %1180 = vmatpush.msra.mxu0 %v494
    %1181 = vmatpush.msra.mxu0 %v490
    %1182 = vmatpush.msra.mxu0 %v486
    %1183 = vmatmul.f32.gmra.mxu0 %v34
    %v1184 = vpop.f32.mrf.mxu0
    %v1185 = vadd.f32 %v1165, %v1184
    %1186 = vdwg.mxu0
    %1187 = vst [vmem:[%s2] sm:$0xff] %v705
    %1188 = vst [vmem:[%s2 + $0x8] sm:$0xff] %v865
    %1189 = vst [vmem:[%s2 + $0x10] sm:$0xff] %v1025
    %1190 = vst [vmem:[%s2 + $0x18] sm:$0xff] %v1185
    // Predicated region
    $region14: #{_linop_apply.1} parent=1 // pred_check
      _
    $region15: #{_linop_apply.1} parent=1 // pred_check_branch
      %1192 = sbr.rel (0) target = $region17
    $region16: #{_linop_apply.1} parent=1 // pred_region
      _
    $region17: #{_linop_apply.1} parent=1 // pred_fallthru
      _
    // Predicated region
    $region18: #{_linop_apply.1} parent=1 // pred_check
      _
    $region19: #{_linop_apply.1} parent=1 // pred_check_branch
      %1194 = sbr.rel (0) target = $region21
    $region20: #{_linop_apply.1} parent=1 // pred_region
      _
    $region21: #{_linop_apply.1} parent=1 // pred_fallthru
      _
    %1195 = vsyncpa [#allocation3], 1

</llo_original>
